<compile_context>
chip_gen: v5e
topology: v5e:2x2
jax: 0.10.0
libtpu: 0.0.40
codegen_flags: <defaults>
</compile_context>

<pallas_src>
import functools

import numpy as np

import jax
import jax.numpy as jnp
from jax import lax
from jax.experimental import pallas as pl
from jax.experimental.pallas import tpu as pltpu


def _round_up(x, m):
    return (x + m - 1) // m * m


def cml_kernel(ui_ref, vj_ref, vk_ref, w_ref, x_ref, seg_ref,
               w1_ref, b1_ref, w2_ref, b2_ref, w3_ref, b3_ref,
               partials_ref, rowsum_ref, gram_ref, new_rank_ref,
               *, margin, rank_ratio, batch_size):
    """Per-batch-tile body.

    Accumulated across the inner ("arbitrary") tile axis, one accumulator per core:
      partials[c, 0, 0] -> sum(w_ij * hinge)          (loss_m partial)
      partials[c, 0, 1] -> sum((feat - vj)**2)         (loss_f partial)
      rowsum[c]         -> sum_rows(ui + vj)           (covariance mean partial)
      gram[c]           -> ui^T ui + vj^T vj           (uncentered covariance partial)
    Per-tile output:
      new_rank          -> log(impostor * item_n / S + 1)
    """
    t = pl.program_id(1)
    g = pl.program_id(0) * pl.num_programs(1) + t     # global batch-tile index
    TB, D = ui_ref.shape
    S = seg_ref.shape[1]

    @pl.when(t == 0)
    def _():
        partials_ref[...] = jnp.zeros_like(partials_ref)
        rowsum_ref[...] = jnp.zeros_like(rowsum_ref)
        gram_ref[...] = jnp.zeros_like(gram_ref)

    ui = ui_ref[...]                                    # (TB, D) f32
    vj = vj_ref[...]                                    # (TB, D) f32
    vk = vk_ref[...]                                    # (TB, S*D) f32, lane-dense
    w_lane = w_ref[0]                                   # (1, TB) f32

    # ---- metric (hinge) loss -----------------------------------------------
    # pos_d - neg_d = (||vj||^2 - 2 ui.vj) - (||vk||^2 - 2 ui.vk)  (||ui||^2 cancels)
    pv = jnp.sum(vj * (vj - 2.0 * ui), axis=1, keepdims=True)          # (TB, 1)
    ui_rep = jnp.tile(ui, (1, S))                                      # (TB, S*D)
    tmp = vk * (vk - 2.0 * ui_rep)                                     # (TB, S*D) VPU, lane-dense
    nm = jnp.dot(tmp, seg_ref[...],
                 preferred_element_type=jnp.float32)                   # (TB, S)  MXU reduce over D
    hinged = jnp.maximum(pv - nm + margin, 0.0)                        # (TB, S)
    # Padded tail rows have w_ij == 0, so they contribute nothing.
    loss_m = jnp.sum(jnp.dot(w_lane, hinged,
                             preferred_element_type=jnp.float32))      # scalar (MXU)

    # ---- item feature extractor MLP (bf16-fed MXU, f32 accumulate) ---------
    # TODO(synk): nn.Dropout(p=0.5) in training mode is stochastic; treated as
    # identity (eval semantics) here.
    row = lax.broadcasted_iota(jnp.int32, (TB, 1), 0) + g * TB
    valid = (row < batch_size).astype(jnp.float32)                     # (TB, 1) kills padded rows
    h1 = jnp.maximum(
        jnp.dot(x_ref[...], w1_ref[...],
                preferred_element_type=jnp.float32) + b1_ref[...], 0.0)            # (TB, H)
    h2 = jnp.maximum(
        jnp.dot(h1.astype(w2_ref.dtype), w2_ref[...],
                preferred_element_type=jnp.float32) + b2_ref[...], 0.0)            # (TB, D)
    # fc layer to 1 output as an explicit reduction (avoids an N=1 matmul).
    feat = jnp.sum(h2 * w3_ref[...], axis=1, keepdims=True) + b3_ref[...]          # (TB, 1)
    loss_f = jnp.sum(valid * (feat - vj) ** 2)                                     # scalar

    # ---- covariance partials (mean-centering finalized in the wrapper) -----
    # Single fused gram over the stacked [ui; vj] rows (padded rows are zero).
    cat = jnp.concatenate([ui, vj], axis=0)                            # (2*TB, D)
    gram_ref[0] += lax.dot_general(cat, cat, (((0,), (0,)), ((), ())),
                                   preferred_element_type=jnp.float32)  # (D, D)
    rowsum_ref[0] += jnp.sum(ui + vj, axis=0, keepdims=True)            # (1, D)

    # ---- packed lane-dense scalar partials (accumulated) -------------------
    lane = lax.broadcasted_iota(jnp.int32, (1, 1, 128), 2)
    partials_ref[...] += (jnp.where(lane == 0, loss_m, 0.0)
                          + jnp.where(lane == 1, loss_f, 0.0))

    # ---- rank update values (scatter into rank_d_ij is JAX glue) -----------
    impostor = jnp.sum((hinged > 0.0).astype(jnp.float32), axis=1, keepdims=True)
    new_rank_ref[...] = jnp.log(impostor * rank_ratio + 1.0)


def _renorm(rows, max_norm=1.0):
    """Emulate nn.Embedding(max_norm=1) renormalization at lookup time."""
    n = jnp.sqrt(jnp.sum(rows * rows, axis=-1, keepdims=True))
    scale = jnp.where(n > max_norm, max_norm / (n + 1e-7), 1.0)
    return rows * scale


def _pad_rows(a, n_rows):
    pad = n_rows - a.shape[0]
    if pad == 0:
        return a
    return jnp.pad(a, [(0, pad)] + [(0, 0)] * (a.ndim - 1))


def cml_forward(params, batch, *, margin, lambda_f, lambda_c,
                neg_sample_size, item_n, tile_b=1024, mxu_dtype=jnp.bfloat16):
    user = batch["user_idx"]
    item = batch["item_idx"]
    neg_item = batch["neg_item_idx"]
    item_x = batch["item_x"].astype(jnp.float32)

    B = int(user.shape[0])
    S = int(neg_item.shape[1])
    D = int(params["emb_user"].shape[1])
    F = int(item_x.shape[1])
    H = int(params["w1"].shape[1])

    # ---- generation-aware knobs (megacore + VMEM budget) -------------------
    try:
        kind = jax.devices()[0].device_kind.lower()
    except Exception:  # pragma: no cover - defensive
        kind = ""
    is_v7 = "v7" in kind
    cores = 2 if is_v7 else 1                      # v7x: 2 TCs; v5e/v6e: 1
    vmem_limit = (48 if is_v7 else 64) * 1024 * 1024
    if is_v7:
        tile_b = min(int(tile_b), 1024)            # 64 MiB VMEM on v7x

    TB = _round_up(min(int(tile_b), _round_up(B, 8)), 8)
    tiles = -(-B // TB)
    tiles_per_core = max(1, -(-tiles // cores))
    total_tiles = cores * tiles_per_core
    B_pad = total_tiles * TB

    # Gathers + max_norm renorm + padding are glue; the hot math lives in the kernel.
    ui = _pad_rows(_renorm(params["emb_user"][user]), B_pad)              # (Bp, D)
    vj = _pad_rows(_renorm(params["emb_item"][item]), B_pad)              # (Bp, D)
    vk = _renorm(params["emb_item"][neg_item]).reshape(B, S * D)          # flat, lane-dense
    vk = _pad_rows(vk, B_pad)                                             # (Bp, S*D)
    w_vec = jnp.pad(params["rank_d_ij"][user, item], (0, B_pad - B))      # (Bp,) zero-padded
    w_lane = w_vec.reshape(total_tiles, 1, TB)                            # lane-dense blocks
    x = _pad_rows(item_x, B_pad).astype(mxu_dtype)                        # (Bp, F) bf16

    # Constant block-diagonal ones matrix: (S*D, S), seg[j, s] = 1 iff j // D == s.
    seg = (np.arange(S * D)[:, None] // D == np.arange(S)[None, :]).astype(np.float32)
    seg_ones = jnp.asarray(seg)

    # bf16-fed MXU (f32 accumulation in-kernel); biases stay f32.
    w1 = params["w1"].astype(mxu_dtype)
    w2 = params["w2"].astype(mxu_dtype)

    kernel = functools.partial(
        cml_kernel,
        margin=float(margin),
        rank_ratio=float(item_n) / float(neg_sample_size),
        batch_size=B)

    tpc = tiles_per_core
    row2 = lambda c, t: (c * tpc + t, 0)
    row3 = lambda c, t: (c * tpc + t, 0, 0)
    const2 = lambda c, t: (0, 0)
    acc3 = lambda c, t: (c, 0, 0)

    in_specs = [
        pl.BlockSpec((TB, D), row2),          # ui
        pl.BlockSpec((TB, D), row2),          # vj
        pl.BlockSpec((TB, S * D), row2),      # vk (flat, lane-dense)
        pl.BlockSpec((1, 1, TB), row3),       # w_ij (lane-dense)
        pl.BlockSpec((TB, F), row2),          # item features (bf16)
        pl.BlockSpec((S * D, S), const2),     # segmented-reduce ones (resident)
        pl.BlockSpec((F, H), const2),         # w1 (resident across tiles)
        pl.BlockSpec((1, H), const2),         # b1
        pl.BlockSpec((H, D), const2),         # w2
        pl.BlockSpec((1, D), const2),         # b2
        pl.BlockSpec((1, D), const2),         # w3 (fc row)
        pl.BlockSpec((1, 1), const2),         # b3
    ]
    out_specs = [
        pl.BlockSpec((1, 1, 128), acc3),      # packed loss accumulators (per core)
        pl.BlockSpec((1, 1, D), acc3),        # row-sum accumulator (per core)
        pl.BlockSpec((1, D, D), acc3),        # gram accumulator (per core)
        pl.BlockSpec((TB, 1), row2),          # new rank values (per tile)
    ]
    out_shape = [
        jax.ShapeDtypeStruct((cores, 1, 128), jnp.float32),
        jax.ShapeDtypeStruct((cores, 1, D), jnp.float32),
        jax.ShapeDtypeStruct((cores, D, D), jnp.float32),
        jax.ShapeDtypeStruct((B_pad, 1), jnp.float32),
    ]

    ins = (ui, vj, vk, w_lane, x, seg_ones,
           w1, params["b1"], w2, params["b2"], params["w3"], params["b3"])

    flops = int(2 * B_pad * (F * H + H * D)    # MLP matmuls
                + 4 * B_pad * D * D            # fused gram over 2B rows
                + 6 * B_pad * S * D            # neg-distance elementwise + MXU reduce
                + 16 * B_pad * D)              # pos distance / fc reduce / misc
    bytes_accessed = int(
        sum(int(a.size) * np.dtype(a.dtype).itemsize for a in ins)
        + sum(int(np.prod(s.shape)) * np.dtype(s.dtype).itemsize for s in out_shape))
    cost = pl.CostEstimate(flops=flops, transcendentals=int(B_pad),
                           bytes_accessed=bytes_accessed)

    partials, rowsum, gram, new_rank = pl.pallas_call(
        kernel,
        grid=(cores, tiles_per_core),
        in_specs=in_specs,
        out_specs=out_specs,
        out_shape=out_shape,
        compiler_params=pltpu.CompilerParams(
            dimension_semantics=("parallel", "arbitrary"),
            vmem_limit_bytes=vmem_limit),
        cost_estimate=cost,
    )(*ins)

    # ---- tiny cross-core finalization in plain JAX (O(cores * D^2)) --------
    loss_m = jnp.sum(partials[:, 0, 0])
    loss_f = jnp.sum(partials[:, 0, 1])

    row_total = jnp.sum(rowsum[:, 0, :], axis=0)                # (D,) over 2B rows
    gram_total = jnp.sum(gram, axis=0)                          # (D, D) uncentered
    mu = row_total / (2.0 * B)
    C = (gram_total - 2.0 * B * jnp.outer(mu, mu)) / B          # == catc.T @ catc / B
    fro = jnp.sqrt(jnp.sum(C * C))
    diag = jnp.sqrt(jnp.sum(jnp.diagonal(C) ** 2))
    loss_c = (fro - diag) / B

    total = loss_m + loss_f * lambda_f + loss_c * lambda_c

    # Stateful update_rank: scatter new values back into rank_d_ij (glue).
    rank_d_ij_new = params["rank_d_ij"].at[user, item].set(new_rank[:B, 0])
    return loss_m, loss_f, loss_c, total, rank_d_ij_new


def _reference(params, batch, *, margin, lambda_f, lambda_c, item_n):
    """Pure-JAX (f32) reference mirroring the PyTorch forward (eval-mode dropout)."""
    user, item, neg_item = batch["user_idx"], batch["item_idx"], batch["neg_item_idx"]
    x = batch["item_x"].astype(jnp.float32)
    B = user.shape[0]
    ui = _renorm(params["emb_user"][user])
    vj = _renorm(params["emb_item"][item])
    vk = _renorm(params["emb_item"][neg_item])
    w_ij = params["rank_d_ij"][user, item][:, None]
    pos_d = jnp.sum((ui - vj) ** 2, axis=1, keepdims=True)
    neg_d = jnp.sum((ui[:, None, :] - vk) ** 2, axis=2)
    hinged = jnp.maximum(pos_d - neg_d + margin, 0.0)
    loss_m = jnp.sum(w_ij * hinged)
    h1 = jnp.maximum(x @ params["w1"] + params["b1"], 0.0)
    h2 = jnp.maximum(h1 @ params["w2"] + params["b2"], 0.0)
    feat = jnp.sum(h2 * params["w3"], axis=1, keepdims=True) + params["b3"]
    loss_f = jnp.sum((feat - vj) ** 2)
    cat = jnp.concatenate([ui, vj], axis=0)
    catc = cat - jnp.mean(cat, axis=0, keepdims=True)
    C = catc.T @ catc / B
    loss_c = (jnp.linalg.norm(C) - jnp.linalg.norm(jnp.diagonal(C))) / B
    total = loss_m + loss_f * lambda_f + loss_c * lambda_c
    return loss_m, loss_f, loss_c, total


if __name__ == "__main__":
    # Small, deterministic configuration (tile_b=8 forces multiple tiles so the
    # accumulator path across the "arbitrary" grid axis is exercised).
    user_n, item_n = 16, 32
    input_dim, latent_dim = 64, 32
    B, S = 16, 4                    # batch, neg_sample_size
    margin, lambda_f, lambda_c = 0.5, 0.1, 1.0

    key = jax.random.PRNGKey(0)
    ks = jax.random.split(key, 12)

    params = {
        "emb_user": jax.random.normal(ks[0], (user_n, latent_dim), jnp.float32) * 0.3,
        "emb_item": jax.random.normal(ks[1], (item_n, latent_dim), jnp.float32) * 0.3,
        "w1": jax.random.normal(ks[2], (input_dim, 256), jnp.float32) * 0.05,
        "b1": jax.random.normal(ks[3], (1, 256), jnp.float32) * 0.01,
        "w2": jax.random.normal(ks[4], (256, latent_dim), jnp.float32) * 0.05,
        "b2": jax.random.normal(ks[5], (1, latent_dim), jnp.float32) * 0.01,
        "w3": jax.random.normal(ks[6], (1, latent_dim), jnp.float32) * 0.05,  # fc weight (row)
        "b3": jax.random.normal(ks[7], (1, 1), jnp.float32) * 0.01,
        "rank_d_ij": jax.random.normal(ks[8], (user_n, item_n), jnp.float32)
                     + item_n / 2.0,
    }

    batch = {
        "user_idx": jax.random.randint(ks[9], (B,), 0, user_n, dtype=jnp.int32),
        "item_idx": jax.random.randint(ks[10], (B,), 0, item_n, dtype=jnp.int32),
        "neg_item_idx": jax.random.randint(ks[11], (B, S), 0, item_n, dtype=jnp.int32),
        "item_x": jax.random.normal(jax.random.fold_in(key, 99), (B, input_dim),
                                    jnp.float32),
    }

    loss_m, loss_f, loss_c, total, rank_new = cml_forward(
        params, batch, margin=margin, lambda_f=lambda_f, lambda_c=lambda_c,
        neg_sample_size=S, item_n=item_n, tile_b=8)
    jax.block_until_ready((loss_m, loss_f, loss_c, total, rank_new))

    # Correctness check against a pure-JAX f32 reference of the PyTorch forward.
    # Tolerance is loosened vs. exact f32 because the MLP matmuls are bf16-fed
    # (f32 accumulation) inside the kernel.
    r_m, r_f, r_c, r_t = _reference(params, batch, margin=margin,
                                    lambda_f=lambda_f, lambda_c=lambda_c,
                                    item_n=item_n)
    np.testing.assert_allclose(np.asarray(loss_m), np.asarray(r_m), rtol=2e-2, atol=2e-2)
    np.testing.assert_allclose(np.asarray(loss_f), np.asarray(r_f), rtol=2e-2, atol=2e-2)
    np.testing.assert_allclose(np.asarray(loss_c), np.asarray(r_c), rtol=2e-2, atol=2e-2)
    np.testing.assert_allclose(np.asarray(total), np.asarray(r_t), rtol=2e-2, atol=2e-2)

    print("KERNEL_OK")
</pallas_src>

<mosaic_0001>
module attributes {stable_mosaic.version = 11 : i64} {
  func.func @cml_kernel(%arg0: i32, %arg1: i32, %arg2: memref<8x32xf32, #tpu.memory_space<vmem>>, %arg3: memref<8x32xf32, #tpu.memory_space<vmem>>, %arg4: memref<8x128xf32, #tpu.memory_space<vmem>>, %arg5: memref<1x1x8xf32, #tpu.memory_space<vmem>>, %arg6: memref<8x64xbf16, #tpu.memory_space<vmem>>, %arg7: memref<128x4xf32, #tpu.memory_space<vmem>>, %arg8: memref<64x256xbf16, #tpu.memory_space<vmem>>, %arg9: memref<1x256xf32, #tpu.memory_space<vmem>>, %arg10: memref<256x32xbf16, #tpu.memory_space<vmem>>, %arg11: memref<1x32xf32, #tpu.memory_space<vmem>>, %arg12: memref<1x32xf32, #tpu.memory_space<vmem>>, %arg13: memref<1x1xf32, #tpu.memory_space<vmem>>, %arg14: memref<1x1x128xf32, #tpu.memory_space<vmem>>, %arg15: memref<1x1x32xf32, #tpu.memory_space<vmem>>, %arg16: memref<1x32x32xf32, #tpu.memory_space<vmem>>, %arg17: memref<8x1xf32, #tpu.memory_space<vmem>>) attributes {dimension_semantics = [#tpu.dimension_semantics<parallel>, #tpu.dimension_semantics<arbitrary>], iteration_bounds = array<i64: 1, 2>, scalar_prefetch = 0 : i64, scratch_operands = 0 : i64, tpu.core_type = #tpu.core_type<tc>, window_params = [{transform_indices = @transform_0, window_bounds = array<i64: 8, 32>}, {transform_indices = @transform_1, window_bounds = array<i64: 8, 32>}, {transform_indices = @transform_2, window_bounds = array<i64: 8, 128>}, {transform_indices = @transform_3, window_bounds = array<i64: 1, 1, 8>}, {transform_indices = @transform_4, window_bounds = array<i64: 8, 64>}, {pipeline_mode = #tpu.pipeline_mode<synchronous>, transform_indices = @transform_5, window_bounds = array<i64: 128, 4>}, {pipeline_mode = #tpu.pipeline_mode<synchronous>, transform_indices = @transform_6, window_bounds = array<i64: 64, 256>}, {pipeline_mode = #tpu.pipeline_mode<synchronous>, transform_indices = @transform_7, window_bounds = array<i64: 1, 256>}, {pipeline_mode = #tpu.pipeline_mode<synchronous>, transform_indices = @transform_8, window_bounds = array<i64: 256, 32>}, {pipeline_mode = #tpu.pipeline_mode<synchronous>, transform_indices = @transform_9, window_bounds = array<i64: 1, 32>}, {pipeline_mode = #tpu.pipeline_mode<synchronous>, transform_indices = @transform_10, window_bounds = array<i64: 1, 32>}, {pipeline_mode = #tpu.pipeline_mode<synchronous>, transform_indices = @transform_11, window_bounds = array<i64: 1, 1>}, {transform_indices = @transform_12, window_bounds = array<i64: 1, 1, 128>}, {transform_indices = @transform_13, window_bounds = array<i64: 1, 1, 32>}, {transform_indices = @transform_14, window_bounds = array<i64: 1, 32, 32>}, {transform_indices = @transform_15, window_bounds = array<i64: 8, 1>}]} {
    %c2_i32 = arith.constant 2 : i32
    %0 = arith.muli %arg0, %c2_i32 : i32
    %1 = arith.addi %0, %arg1 : i32
    %c0_i32 = arith.constant 0 : i32
    %2 = arith.cmpi eq, %arg1, %c0_i32 : i32
    %3 = arith.extui %2 : i1 to i32
    %c0_i32_0 = arith.constant 0 : i32
    %4 = arith.cmpi ne, %3, %c0_i32_0 : i32
    scf.if %4 {
      %cst_67 = arith.constant 0.000000e+00 : f32
      %119 = vector.broadcast %cst_67 : f32 to vector<1x1x128xf32>
      %c0_68 = arith.constant 0 : index
      %c0_69 = arith.constant 0 : index
      %c0_70 = arith.constant 0 : index
      %120 = vector.load %arg14[%c0_68, %c0_69, %c0_70] : memref<1x1x128xf32, #tpu.memory_space<vmem>>, vector<1x1x128xf32>
      tpu.vector_store %arg14[%c0_68, %c0_69, %c0_70], %119 {strides = array<i32>} : memref<1x1x128xf32, #tpu.memory_space<vmem>>, vector<1x1x128xf32>,
      %cst_71 = arith.constant 0.000000e+00 : f32
      %121 = vector.broadcast %cst_71 : f32 to vector<1x1x32xf32>
      %c0_72 = arith.constant 0 : index
      %c0_73 = arith.constant 0 : index
      %c0_74 = arith.constant 0 : index
      %122 = vector.load %arg15[%c0_72, %c0_73, %c0_74] : memref<1x1x32xf32, #tpu.memory_space<vmem>>, vector<1x1x32xf32>
      tpu.vector_store %arg15[%c0_72, %c0_73, %c0_74], %121 {strides = array<i32>} : memref<1x1x32xf32, #tpu.memory_space<vmem>>, vector<1x1x32xf32>,
      %cst_75 = arith.constant 0.000000e+00 : f32
      %123 = vector.broadcast %cst_75 : f32 to vector<1x32x32xf32>
      %c0_76 = arith.constant 0 : index
      %c0_77 = arith.constant 0 : index
      %c0_78 = arith.constant 0 : index
      %124 = vector.load %arg16[%c0_76, %c0_77, %c0_78] : memref<1x32x32xf32, #tpu.memory_space<vmem>>, vector<1x32x32xf32>
      tpu.vector_store %arg16[%c0_76, %c0_77, %c0_78], %123 {strides = array<i32>} : memref<1x32x32xf32, #tpu.memory_space<vmem>>, vector<1x32x32xf32>,
    } else {
    }
    %c0 = arith.constant 0 : index
    %c0_1 = arith.constant 0 : index
    %5 = vector.load %arg2[%c0, %c0_1] : memref<8x32xf32, #tpu.memory_space<vmem>>, vector<8x32xf32>
    %c0_2 = arith.constant 0 : index
    %c0_3 = arith.constant 0 : index
    %6 = vector.load %arg3[%c0_2, %c0_3] : memref<8x32xf32, #tpu.memory_space<vmem>>, vector<8x32xf32>
    %c0_4 = arith.constant 0 : index
    %c0_5 = arith.constant 0 : index
    %7 = vector.load %arg4[%c0_4, %c0_5] : memref<8x128xf32, #tpu.memory_space<vmem>>, vector<8x128xf32>
    %c0_6 = arith.constant 0 : index
    %c0_7 = arith.constant 0 : index
    %c0_8 = arith.constant 0 : index
    %8 = vector.load %arg5[%c0_6, %c0_7, %c0_8] : memref<1x1x8xf32, #tpu.memory_space<vmem>>, vector<1x1x8xf32>
    %9 = vector.shape_cast %8 : vector<1x1x8xf32> to vector<1x8xf32>
    %cst = arith.constant 2.000000e+00 : f32
    %10 = vector.broadcast %cst : f32 to vector<8x32xf32>
    %11 = arith.mulf %10, %5 : vector<8x32xf32>
    %12 = arith.subf %6, %11 : vector<8x32xf32>
    %13 = arith.mulf %6, %12 : vector<8x32xf32>
    %cst_9 = arith.constant dense<0.000000e+00> : vector<8xf32>
    %14 = vector.multi_reduction <add>, %13, %cst_9 [1] : vector<8x32xf32> to vector<8xf32>
    %15 = vector.shape_cast %14 : vector<8xf32> to vector<8x1xf32>
    %16 = tpu.concatenate %5, %5, %5, %5 in 1 : vector<8x32xf32>, vector<8x32xf32>, vector<8x32xf32>, vector<8x32xf32> -> vector<8x128xf32>
    %cst_10 = arith.constant 2.000000e+00 : f32
    %17 = vector.broadcast %cst_10 : f32 to vector<8x128xf32>
    %18 = arith.mulf %17, %16 : vector<8x128xf32>
    %19 = arith.subf %7, %18 : vector<8x128xf32>
    %20 = arith.mulf %7, %19 : vector<8x128xf32>
    %c0_11 = arith.constant 0 : index
    %c0_12 = arith.constant 0 : index
    %21 = vector.load %arg7[%c0_11, %c0_12] : memref<128x4xf32, #tpu.memory_space<vmem>>, vector<128x4xf32>
    %cst_13 = arith.constant dense<0.000000e+00> : vector<8x4xf32>
    %22 = tpu.matmul %20, %21, %cst_13 {dimension_numbers = #tpu.dot_dimension_numbers<[1], [0], [0], [1], [0, 0, 1, 1], [], []>} : vector<8x128xf32>, vector<128x4xf32>, vector<8x4xf32> -> vector<8x4xf32>
    %23 = vector.broadcast %15 : vector<8x1xf32> to vector<8x4xf32>
    %24 = arith.subf %23, %22 : vector<8x4xf32>
    %cst_14 = arith.constant 5.000000e-01 : f32
    %25 = vector.broadcast %cst_14 : f32 to vector<8x4xf32>
    %26 = arith.addf %24, %25 : vector<8x4xf32>
    %cst_15 = arith.constant 0.000000e+00 : f32
    %27 = vector.broadcast %cst_15 : f32 to vector<8x4xf32>
    %28 = arith.maximumf %26, %27 : vector<8x4xf32>
    %cst_16 = arith.constant dense<0.000000e+00> : vector<1x4xf32>
    %29 = tpu.matmul %9, %28, %cst_16 {dimension_numbers = #tpu.dot_dimension_numbers<[1], [0], [0], [1], [0, 0, 1, 1], [], []>} : vector<1x8xf32>, vector<8x4xf32>, vector<1x4xf32> -> vector<1x4xf32>
    %30 = vector.shape_cast %29 : vector<1x4xf32> to vector<1x1x4xf32>
    %cst_17 = arith.constant dense<0.000000e+00> : vector<1xf32>
    %31 = vector.multi_reduction <add>, %30, %cst_17 [1, 2] : vector<1x1x4xf32> to vector<1xf32>
    %32 = vector.shape_cast %31 : vector<1xf32> to vector<1x1x1xf32>
    %33 = vector.extract %32[0, 0, 0] : f32 from vector<1x1x1xf32>
    %34 = tpu.iota {dimensions = array<i32: 0>} : vector<8x1xi32>
    %c8_i32 = arith.constant 8 : i32
    %35 = arith.muli %1, %c8_i32 : i32
    %36 = vector.broadcast %35 : i32 to vector<8x1xi32>
    %37 = arith.addi %34, %36 : vector<8x1xi32>
    %c16_i32 = arith.constant 16 : i32
    %38 = vector.broadcast %c16_i32 : i32 to vector<8x1xi32>
    %39 = arith.cmpi slt, %37, %38 : vector<8x1xi32>
    %40 = arith.extui %39 : vector<8x1xi1> to vector<8x1xi32>
    %41 = arith.sitofp %40 : vector<8x1xi32> to vector<8x1xf32>
    %c0_18 = arith.constant 0 : index
    %c0_19 = arith.constant 0 : index
    %42 = vector.load %arg6[%c0_18, %c0_19] : memref<8x64xbf16, #tpu.memory_space<vmem>>, vector<8x64xbf16>
    %c0_20 = arith.constant 0 : index
    %c0_21 = arith.constant 0 : index
    %43 = vector.load %arg8[%c0_20, %c0_21] : memref<64x256xbf16, #tpu.memory_space<vmem>>, vector<64x256xbf16>
    %cst_22 = arith.constant dense<0.000000e+00> : vector<8x256xf32>
    %44 = tpu.matmul %42, %43, %cst_22 {dimension_numbers = #tpu.dot_dimension_numbers<[1], [0], [0], [1], [0, 0, 1, 1], [], []>} : vector<8x64xbf16>, vector<64x256xbf16>, vector<8x256xf32> -> vector<8x256xf32>
    %c0_23 = arith.constant 0 : index
    %c0_24 = arith.constant 0 : index
    %45 = vector.load %arg9[%c0_23, %c0_24] : memref<1x256xf32, #tpu.memory_space<vmem>>, vector<1x256xf32>
    %46 = vector.broadcast %45 : vector<1x256xf32> to vector<8x256xf32>
    %47 = arith.addf %44, %46 : vector<8x256xf32>
    %cst_25 = arith.constant 0.000000e+00 : f32
    %48 = vector.broadcast %cst_25 : f32 to vector<8x256xf32>
    %49 = arith.maximumf %47, %48 : vector<8x256xf32>
    %50 = arith.truncf %49 : vector<8x256xf32> to vector<8x256xbf16>
    %c0_26 = arith.constant 0 : index
    %c0_27 = arith.constant 0 : index
    %51 = vector.load %arg10[%c0_26, %c0_27] : memref<256x32xbf16, #tpu.memory_space<vmem>>, vector<256x32xbf16>
    %cst_28 = arith.constant dense<0.000000e+00> : vector<8x32xf32>
    %52 = tpu.matmul %50, %51, %cst_28 {dimension_numbers = #tpu.dot_dimension_numbers<[1], [0], [0], [1], [0, 0, 1, 1], [], []>} : vector<8x256xbf16>, vector<256x32xbf16>, vector<8x32xf32> -> vector<8x32xf32>
    %c0_29 = arith.constant 0 : index
    %c0_30 = arith.constant 0 : index
    %53 = vector.load %arg11[%c0_29, %c0_30] : memref<1x32xf32, #tpu.memory_space<vmem>>, vector<1x32xf32>
    %54 = vector.broadcast %53 : vector<1x32xf32> to vector<8x32xf32>
    %55 = arith.addf %52, %54 : vector<8x32xf32>
    %cst_31 = arith.constant 0.000000e+00 : f32
    %56 = vector.broadcast %cst_31 : f32 to vector<8x32xf32>
    %57 = arith.maximumf %55, %56 : vector<8x32xf32>
    %c0_32 = arith.constant 0 : index
    %c0_33 = arith.constant 0 : index
    %58 = vector.load %arg12[%c0_32, %c0_33] : memref<1x32xf32, #tpu.memory_space<vmem>>, vector<1x32xf32>
    %59 = vector.broadcast %58 : vector<1x32xf32> to vector<8x32xf32>
    %60 = arith.mulf %57, %59 : vector<8x32xf32>
    %cst_34 = arith.constant dense<0.000000e+00> : vector<8xf32>
    %61 = vector.multi_reduction <add>, %60, %cst_34 [1] : vector<8x32xf32> to vector<8xf32>
    %62 = vector.shape_cast %61 : vector<8xf32> to vector<8x1xf32>
    %c0_35 = arith.constant 0 : index
    %c0_36 = arith.constant 0 : index
    %63 = vector.load %arg13[%c0_35, %c0_36] : memref<1x1xf32, #tpu.memory_space<vmem>>, vector<1x1xf32>
    %64 = vector.broadcast %63 : vector<1x1xf32> to vector<8x1xf32>
    %65 = arith.addf %62, %64 : vector<8x1xf32>
    %66 = vector.broadcast %65 : vector<8x1xf32> to vector<8x32xf32>
    %67 = arith.subf %66, %6 : vector<8x32xf32>
    %68 = arith.mulf %67, %67 : vector<8x32xf32>
    %69 = vector.broadcast %41 : vector<8x1xf32> to vector<8x32xf32>
    %70 = arith.mulf %69, %68 : vector<8x32xf32>
    %71 = vector.shape_cast %70 : vector<8x32xf32> to vector<1x8x32xf32>
    %cst_37 = arith.constant dense<0.000000e+00> : vector<1xf32>
    %72 = vector.multi_reduction <add>, %71, %cst_37 [1, 2] : vector<1x8x32xf32> to vector<1xf32>
    %73 = vector.shape_cast %72 : vector<1xf32> to vector<1x1x1xf32>
    %74 = vector.extract %73[0, 0, 0] : f32 from vector<1x1x1xf32>
    %75 = tpu.concatenate %5, %6 in 0 : vector<8x32xf32>, vector<8x32xf32> -> vector<16x32xf32>
    %c0_38 = arith.constant 0 : index
    %c0_39 = arith.constant 0 : index
    %c0_40 = arith.constant 0 : index
    %76 = vector.load %arg16[%c0_38, %c0_39, %c0_40] : memref<1x32x32xf32, #tpu.memory_space<vmem>>, vector<1x32x32xf32>
    %77 = vector.shape_cast %76 : vector<1x32x32xf32> to vector<32x32xf32>
    %cst_41 = arith.constant dense<0.000000e+00> : vector<32x32xf32>
    %78 = tpu.matmul %75, %75, %cst_41 {dimension_numbers = #tpu.dot_dimension_numbers<[0], [0], [1], [1], [0, 1, 1, 1], [], []>} : vector<16x32xf32>, vector<16x32xf32>, vector<32x32xf32> -> vector<32x32xf32>
    %79 = arith.addf %77, %78 : vector<32x32xf32>
    %c0_42 = arith.constant 0 : index
    %c0_43 = arith.constant 0 : index
    %c0_44 = arith.constant 0 : index
    %80 = vector.load %arg16[%c0_42, %c0_43, %c0_44] : memref<1x32x32xf32, #tpu.memory_space<vmem>>, vector<1x32x32xf32>
    %81 = vector.shape_cast %80 : vector<1x32x32xf32> to vector<32x32xf32>
    %82 = vector.shape_cast %79 : vector<32x32xf32> to vector<1x32x32xf32>
    tpu.vector_store %arg16[%c0_42, %c0_43, %c0_44], %82 {strides = array<i32>} : memref<1x32x32xf32, #tpu.memory_space<vmem>>, vector<1x32x32xf32>,
    %c0_45 = arith.constant 0 : index
    %c0_46 = arith.constant 0 : index
    %c0_47 = arith.constant 0 : index
    %83 = vector.load %arg15[%c0_45, %c0_46, %c0_47] : memref<1x1x32xf32, #tpu.memory_space<vmem>>, vector<1x1x32xf32>
    %84 = vector.shape_cast %83 : vector<1x1x32xf32> to vector<1x32xf32>
    %85 = arith.addf %5, %6 : vector<8x32xf32>
    %cst_48 = arith.constant dense<0.000000e+00> : vector<32xf32>
    %86 = vector.multi_reduction <add>, %85, %cst_48 [0] : vector<8x32xf32> to vector<32xf32>
    %87 = vector.shape_cast %86 : vector<32xf32> to vector<1x32xf32>
    %88 = arith.addf %84, %87 : vector<1x32xf32>
    %c0_49 = arith.constant 0 : index
    %c0_50 = arith.constant 0 : index
    %c0_51 = arith.constant 0 : index
    %89 = vector.load %arg15[%c0_49, %c0_50, %c0_51] : memref<1x1x32xf32, #tpu.memory_space<vmem>>, vector<1x1x32xf32>
    %90 = vector.shape_cast %89 : vector<1x1x32xf32> to vector<1x32xf32>
    %91 = vector.shape_cast %88 : vector<1x32xf32> to vector<1x1x32xf32>
    tpu.vector_store %arg15[%c0_49, %c0_50, %c0_51], %91 {strides = array<i32>} : memref<1x1x32xf32, #tpu.memory_space<vmem>>, vector<1x1x32xf32>,
    %92 = tpu.iota {dimensions = array<i32: 2>} : vector<1x1x128xi32>
    %c0_52 = arith.constant 0 : index
    %c0_53 = arith.constant 0 : index
    %c0_54 = arith.constant 0 : index
    %93 = vector.load %arg14[%c0_52, %c0_53, %c0_54] : memref<1x1x128xf32, #tpu.memory_space<vmem>>, vector<1x1x128xf32>
    %c0_i32_55 = arith.constant 0 : i32
    %94 = vector.broadcast %c0_i32_55 : i32 to vector<1x1x128xi32>
    %95 = arith.cmpi eq, %92, %94 : vector<1x1x128xi32>
    %cst_56 = arith.constant 0.000000e+00 : f32
    %96 = vector.broadcast %33 : f32 to vector<1x1x128xf32>
    %97 = vector.broadcast %cst_56 : f32 to vector<1x1x128xf32>
    %98 = arith.select %95, %96, %97 : vector<1x1x128xi1>, vector<1x1x128xf32>
    %c1_i32 = arith.constant 1 : i32
    %99 = vector.broadcast %c1_i32 : i32 to vector<1x1x128xi32>
    %100 = arith.cmpi eq, %92, %99 : vector<1x1x128xi32>
    %cst_57 = arith.constant 0.000000e+00 : f32
    %101 = vector.broadcast %74 : f32 to vector<1x1x128xf32>
    %102 = vector.broadcast %cst_57 : f32 to vector<1x1x128xf32>
    %103 = arith.select %100, %101, %102 : vector<1x1x128xi1>, vector<1x1x128xf32>
    %104 = arith.addf %98, %103 : vector<1x1x128xf32>
    %105 = arith.addf %93, %104 : vector<1x1x128xf32>
    %c0_58 = arith.constant 0 : index
    %c0_59 = arith.constant 0 : index
    %c0_60 = arith.constant 0 : index
    %106 = vector.load %arg14[%c0_58, %c0_59, %c0_60] : memref<1x1x128xf32, #tpu.memory_space<vmem>>, vector<1x1x128xf32>
    tpu.vector_store %arg14[%c0_58, %c0_59, %c0_60], %105 {strides = array<i32>} : memref<1x1x128xf32, #tpu.memory_space<vmem>>, vector<1x1x128xf32>,
    %cst_61 = arith.constant 0.000000e+00 : f32
    %107 = vector.broadcast %cst_61 : f32 to vector<8x4xf32>
    %108 = arith.cmpf ogt, %28, %107 : vector<8x4xf32>
    %109 = arith.extui %108 : vector<8x4xi1> to vector<8x4xi32>
    %110 = arith.sitofp %109 : vector<8x4xi32> to vector<8x4xf32>
    %cst_62 = arith.constant dense<0.000000e+00> : vector<8xf32>
    %111 = vector.multi_reduction <add>, %110, %cst_62 [1] : vector<8x4xf32> to vector<8xf32>
    %112 = vector.shape_cast %111 : vector<8xf32> to vector<8x1xf32>
    %cst_63 = arith.constant 8.000000e+00 : f32
    %113 = vector.broadcast %cst_63 : f32 to vector<8x1xf32>
    %114 = arith.mulf %112, %113 : vector<8x1xf32>
    %cst_64 = arith.constant 1.000000e+00 : f32
    %115 = vector.broadcast %cst_64 : f32 to vector<8x1xf32>
    %116 = arith.addf %114, %115 : vector<8x1xf32>
    %117 = math.log %116 : vector<8x1xf32>
    %c0_65 = arith.constant 0 : index
    %c0_66 = arith.constant 0 : index
    %118 = vector.load %arg17[%c0_65, %c0_66] : memref<8x1xf32, #tpu.memory_space<vmem>>, vector<8x1xf32>
    tpu.vector_store %arg17[%c0_65, %c0_66], %117 {strides = array<i32>} : memref<8x1xf32, #tpu.memory_space<vmem>>, vector<8x1xf32>,
    return
  }
  func.func @transform_0(%arg0: i32, %arg1: i32) -> (i32, i32) {
    %c2_i32 = arith.constant 2 : i32
    %0 = arith.muli %arg0, %c2_i32 : i32
    %1 = arith.addi %0, %arg1 : i32
    %c0_i32 = arith.constant 0 : i32
    %c0_i32_0 = arith.constant 0 : i32
    return %1, %c0_i32 : i32, i32
  }
  func.func @transform_1(%arg0: i32, %arg1: i32) -> (i32, i32) {
    %c2_i32 = arith.constant 2 : i32
    %0 = arith.muli %arg0, %c2_i32 : i32
    %1 = arith.addi %0, %arg1 : i32
    %c0_i32 = arith.constant 0 : i32
    %c0_i32_0 = arith.constant 0 : i32
    return %1, %c0_i32 : i32, i32
  }
  func.func @transform_2(%arg0: i32, %arg1: i32) -> (i32, i32) {
    %c2_i32 = arith.constant 2 : i32
    %0 = arith.muli %arg0, %c2_i32 : i32
    %1 = arith.addi %0, %arg1 : i32
    %c0_i32 = arith.constant 0 : i32
    %c0_i32_0 = arith.constant 0 : i32
    return %1, %c0_i32 : i32, i32
  }
  func.func @transform_3(%arg0: i32, %arg1: i32) -> (i32, i32, i32) {
    %c2_i32 = arith.constant 2 : i32
    %0 = arith.muli %arg0, %c2_i32 : i32
    %1 = arith.addi %0, %arg1 : i32
    %c0_i32 = arith.constant 0 : i32
    %c0_i32_0 = arith.constant 0 : i32
    %c0_i32_1 = arith.constant 0 : i32
    return %1, %c0_i32, %c0_i32_0 : i32, i32, i32
  }
  func.func @transform_4(%arg0: i32, %arg1: i32) -> (i32, i32) {
    %c2_i32 = arith.constant 2 : i32
    %0 = arith.muli %arg0, %c2_i32 : i32
    %1 = arith.addi %0, %arg1 : i32
    %c0_i32 = arith.constant 0 : i32
    %c0_i32_0 = arith.constant 0 : i32
    return %1, %c0_i32 : i32, i32
  }
  func.func @transform_5(%arg0: i32, %arg1: i32) -> (i32, i32) {
    %c0_i32 = arith.constant 0 : i32
    %c0_i32_0 = arith.constant 0 : i32
    %c0_i32_1 = arith.constant 0 : i32
    return %c0_i32, %c0_i32_0 : i32, i32
  }
  func.func @transform_6(%arg0: i32, %arg1: i32) -> (i32, i32) {
    %c0_i32 = arith.constant 0 : i32
    %c0_i32_0 = arith.constant 0 : i32
    %c0_i32_1 = arith.constant 0 : i32
    return %c0_i32, %c0_i32_0 : i32, i32
  }
  func.func @transform_7(%arg0: i32, %arg1: i32) -> (i32, i32) {
    %c0_i32 = arith.constant 0 : i32
    %c0_i32_0 = arith.constant 0 : i32
    %c0_i32_1 = arith.constant 0 : i32
    return %c0_i32, %c0_i32_0 : i32, i32
  }
  func.func @transform_8(%arg0: i32, %arg1: i32) -> (i32, i32) {
    %c0_i32 = arith.constant 0 : i32
    %c0_i32_0 = arith.constant 0 : i32
    %c0_i32_1 = arith.constant 0 : i32
    return %c0_i32, %c0_i32_0 : i32, i32
  }
  func.func @transform_9(%arg0: i32, %arg1: i32) -> (i32, i32) {
    %c0_i32 = arith.constant 0 : i32
    %c0_i32_0 = arith.constant 0 : i32
    %c0_i32_1 = arith.constant 0 : i32
    return %c0_i32, %c0_i32_0 : i32, i32
  }
  func.func @transform_10(%arg0: i32, %arg1: i32) -> (i32, i32) {
    %c0_i32 = arith.constant 0 : i32
    %c0_i32_0 = arith.constant 0 : i32
    %c0_i32_1 = arith.constant 0 : i32
    return %c0_i32, %c0_i32_0 : i32, i32
  }
  func.func @transform_11(%arg0: i32, %arg1: i32) -> (i32, i32) {
    %c0_i32 = arith.constant 0 : i32
    %c0_i32_0 = arith.constant 0 : i32
    %c0_i32_1 = arith.constant 0 : i32
    return %c0_i32, %c0_i32_0 : i32, i32
  }
  func.func @transform_12(%arg0: i32, %arg1: i32) -> (i32, i32, i32) {
    %c0_i32 = arith.constant 0 : i32
    %c0_i32_0 = arith.constant 0 : i32
    %c0_i32_1 = arith.constant 0 : i32
    return %arg0, %c0_i32, %c0_i32_0 : i32, i32, i32
  }
  func.func @transform_13(%arg0: i32, %arg1: i32) -> (i32, i32, i32) {
    %c0_i32 = arith.constant 0 : i32
    %c0_i32_0 = arith.constant 0 : i32
    %c0_i32_1 = arith.constant 0 : i32
    return %arg0, %c0_i32, %c0_i32_0 : i32, i32, i32
  }
  func.func @transform_14(%arg0: i32, %arg1: i32) -> (i32, i32, i32) {
    %c0_i32 = arith.constant 0 : i32
    %c0_i32_0 = arith.constant 0 : i32
    %c0_i32_1 = arith.constant 0 : i32
    return %arg0, %c0_i32, %c0_i32_0 : i32, i32, i32
  }
  func.func @transform_15(%arg0: i32, %arg1: i32) -> (i32, i32) {
    %c2_i32 = arith.constant 2 : i32
    %0 = arith.muli %arg0, %c2_i32 : i32
    %1 = arith.addi %0, %arg1 : i32
    %c0_i32 = arith.constant 0 : i32
    %c0_i32_0 = arith.constant 0 : i32
    return %1, %c0_i32 : i32, i32
  }
}

</mosaic_0001>

<llo_original>
// kernel: tpu_custom_call.1
$region0: #{tpu_custom_call.1}
  #allocation0 [shape = 'u32[]', space=smem, size = 0x4, offset = 0x4, fixed_abs, tag = 'smem constant byte address 0x4 - core index']
  #allocation1 [shape = 'u32[72,128]{1,0:T(1,128)}', space=vmem, size = 0x9000, scoped, tag = 'internal scratch']
  #allocation2 [shape = 'f32[1,1]{1,0:T(1,128)S(1)}', space=vmem, size = 0x200, scoped, tag = 'scoped memory for tpu_custom_call.1']
  %s0 = inlined_call_operand.vmem [shape: f32[16,32], index: 0, kind: input, shape index: {}]
  %s1 = inlined_call_operand.vmem [shape: f32[16,32], index: 1, kind: input, shape index: {}]
  %s2 = inlined_call_operand.vmem [shape: f32[16,128], index: 2, kind: input, shape index: {}]
  %s3 = inlined_call_operand.vmem [shape: f32[2,1,8], index: 3, kind: input, shape index: {}]
  %s4 = inlined_call_operand.vmem [shape: bf16[16,64], index: 4, kind: input, shape index: {}]
  %s5 = inlined_call_operand.vmem [shape: f32[128,4], index: 5, kind: input, shape index: {}]
  %s6 = inlined_call_operand.vmem [shape: bf16[64,256], index: 6, kind: input, shape index: {}]
  %s7 = inlined_call_operand.vmem [shape: f32[1,256], index: 7, kind: input, shape index: {}]
  %s8 = inlined_call_operand.vmem [shape: bf16[256,32], index: 8, kind: input, shape index: {}]
  %s9 = inlined_call_operand.vmem [shape: f32[1,32], index: 9, kind: input, shape index: {}]
  %s10 = inlined_call_operand.vmem [shape: f32[1,32], index: 10, kind: input, shape index: {}]
  %s11 = inlined_call_operand.<no memory space> [shape: f32[1,1], index: 11, kind: input, shape index: {}]
  %s12 = inlined_call_operand.hbm [shape: f32[1,1,128], index: 12, kind: output, shape index: {0}]
  %s13 = inlined_call_operand.hbm [shape: f32[1,1,32], index: 13, kind: output, shape index: {1}]
  %s14 = inlined_call_operand.hbm [shape: f32[1,32,32], index: 14, kind: output, shape index: {2}]
  %s15 = inlined_call_operand.vmem [shape: f32[16,1], index: 15, kind: output, shape index: {3}]
  %16 = xla_tuple %s12, %s13, %s14, %s15
  %s17 = sld [smem:[#allocation0]]
  $region109: #{tpu_custom_call.1} parent=0
    _
  %s19 = ssub.s32 1, %s17
  %s20 = scalar_select 0, %s19, %s17
  %v21 = vstv %s11
  %22 = vst [vmem:[#allocation2] sm:$0x1] %v21
  $region1: #{tpu_custom_call.1} parent=0
    #allocation3 [shape = 'u8[512]{0}', space=vmem, size = 0x400, scoped, tag = 'output window, operand 0, single buffered']
    #allocation4 [shape = 's32[2]{0}', space=sflag, size = 0x8, scoped, tag = 'scoped memory for tpu_custom_call.1']
    #allocation5 [shape = 'u8[512]{0}', space=vmem, size = 0x400, scoped, tag = 'output window, operand 1, single buffered']
    #allocation6 [shape = 's32[1]{0}', space=sflag, size = 0x4, scoped, tag = 'scoped memory for tpu_custom_call.1']
    #allocation7 [shape = 'u8[16384]{0}', space=vmem, size = 0x4000, scoped, tag = 'output window, operand 2, single buffered']
    %23 = vsyncpa [#allocation4], 0
    %24 = vsyncpa [#allocation6], 0
    loop: start=0, step=1, limit=4
    $region2: #{tpu_custom_call.1} parent=1 // loop_pre_header
      _
    $region3: #{tpu_custom_call.1} parent=1 // loop_header
      %s26 = sphi 0, %s30
      %p27 = scmp.ge.s32.totalorder %s26, 4
      %s33 = sphi 0, %s45
      %s34 = sphi 0, %s41
      %s35 = sphi 0, %s33
      %s36 = sphi 0, %s34
      %s37 = sphi 0, %s35
      %s38 = sphi 0, %s36
      %s52 = sphi 0, %s54
      %s55 = sphi 0, %s52
      %s56 = sphi 0, %s55
      %s72 = sphi 0, %s56
      %s82 = sphi 0, %s84
      %s85 = sphi 0, %s82
      %s86 = sphi 0, %s85
      %s102 = sphi 0, %s86
      %s112 = sphi 0, %s114
      %s115 = sphi 0, %s112
      %s116 = sphi 0, %s115
      %s132 = sphi 0, %s116
      %s142 = sphi 0, %s144
      %s145 = sphi 0, %s142
      %s146 = sphi 0, %s145
      %s162 = sphi 0, %s146
      %s172 = sphi 0, %s174
      %s175 = sphi 0, %s172
      %s176 = sphi 0, %s175
      %s192 = sphi 0, %s176
      %s196 = sphi 0, %s196
      %s198 = sphi 0, %s196
      %s199 = sphi 0, %s198
      %s213 = sphi 0, %s199
      %s217 = sphi 0, %s217
      %s219 = sphi 0, %s217
      %s220 = sphi 0, %s219
      %s234 = sphi 0, %s220
      %s238 = sphi 0, %s238
      %s240 = sphi 0, %s238
      %s241 = sphi 0, %s240
      %s255 = sphi 0, %s241
      %s259 = sphi 0, %s259
      %s261 = sphi 0, %s259
      %s262 = sphi 0, %s261
      %s276 = sphi 0, %s262
      %s280 = sphi 0, %s280
      %s282 = sphi 0, %s280
      %s283 = sphi 0, %s282
      %s297 = sphi 0, %s283
      %s301 = sphi 0, %s301
      %s303 = sphi 0, %s301
      %s304 = sphi 0, %s303
      %s318 = sphi 0, %s304
      %s322 = sphi 0, %s322
      %s324 = sphi 0, %s322
      %s325 = sphi 0, %s324
      %s339 = sphi 0, %s325
      %s345 = sphi 0, %s347
      %s348 = sphi 0, %s345
      %s349 = sphi 0, %s348
      %s365 = sphi 0, %s349
      %s371 = sphi 0, %s373
      %s374 = sphi 0, %s371
      %s375 = sphi 0, %s374
      %s391 = sphi 0, %s375
      %s397 = sphi 0, %s399
      %s400 = sphi 0, %s397
      %s401 = sphi 0, %s400
      %s417 = sphi 0, %s401
      %s427 = sphi 0, %s429
      %s430 = sphi 0, %s427
      %s431 = sphi 0, %s430
      %s447 = sphi 0, %s431
    $region4: #{tpu_custom_call.1} parent=1 // loop_header_branch
      %29 = sbr.rel (%p27) target = $region8
    $region5: #{tpu_custom_call.1} parent=1 // loop_body
      %s31 = ssub.s32 %s26, 1
      %s32 = ssub.s32 %s26, 2
      %s39 = sadd.s32 1, %s34
      %p40 = scmp.ge.s32.totalorder %s39, 2
      %s41 = scalar_select %p40, 0, %s39
      %s42 = sadd.s32 1, %s33
      %s43 = scalar_select %p40, %s42, %s33
      %p44 = scmp.ge.s32.totalorder %s43, 1
      %s45 = scalar_select %p44, 0, %s43
      %s46 = smul.u32 %s33, 2
      %s47 = sadd.s32 %s46, %s34
      %s48 = smul.u32 %s45, 2
      %s49 = sadd.s32 %s48, %s41
      %s50 = ssub.s32 %s47, %s49
      %p51 = scmp.eq.s32.totalorder %s50, 0
      %s53 = sadd.s32 %s52, 1
      %s54 = scalar_select %p51, %s52, %s53
      %p57 = pneg %p51
      %p58 = scmp.eq.s32.totalorder %s26, 1
      %p59 = por %p57, %p58
      %p60 = scmp.ne.s32.totalorder %s52, %s55
      %p61 = scmp.eq.s32.totalorder %s26, 0
      %p62 = por %p60, %p61
      %p63 = scmp.ne.s32.totalorder %s52, %s55
      %p64 = scmp.eq.s32.totalorder %s31, 1
      %p65 = por %p63, %p64
      %p66 = scmp.ne.s32.totalorder %s55, %s56
      %p67 = scmp.eq.s32.totalorder %s31, 0
      %p68 = por %p66, %p67
      %p69 = scmp.ne.s32.totalorder %s55, %s56
      %p70 = scmp.eq.s32.totalorder %s32, 1
      %p71 = por %p69, %p70
      %p73 = scmp.ne.s32.totalorder %s56, %s72
      %p74 = scmp.eq.s32.totalorder %s32, 0
      %p75 = por %p73, %p74
      %s76 = smul.u32 %s33, 2
      %s77 = sadd.s32 %s76, %s34
      %s78 = smul.u32 %s45, 2
      %s79 = sadd.s32 %s78, %s41
      %s80 = ssub.s32 %s77, %s79
      %p81 = scmp.eq.s32.totalorder %s80, 0
      %s83 = sadd.s32 %s82, 1
      %s84 = scalar_select %p81, %s82, %s83
      %p87 = pneg %p81
      %p88 = scmp.eq.s32.totalorder %s26, 1
      %p89 = por %p87, %p88
      %p90 = scmp.ne.s32.totalorder %s82, %s85
      %p91 = scmp.eq.s32.totalorder %s26, 0
      %p92 = por %p90, %p91
      %p93 = scmp.ne.s32.totalorder %s82, %s85
      %p94 = scmp.eq.s32.totalorder %s31, 1
      %p95 = por %p93, %p94
      %p96 = scmp.ne.s32.totalorder %s85, %s86
      %p97 = scmp.eq.s32.totalorder %s31, 0
      %p98 = por %p96, %p97
      %p99 = scmp.ne.s32.totalorder %s85, %s86
      %p100 = scmp.eq.s32.totalorder %s32, 1
      %p101 = por %p99, %p100
      %p103 = scmp.ne.s32.totalorder %s86, %s102
      %p104 = scmp.eq.s32.totalorder %s32, 0
      %p105 = por %p103, %p104
      %s106 = smul.u32 %s33, 2
      %s107 = sadd.s32 %s106, %s34
      %s108 = smul.u32 %s45, 2
      %s109 = sadd.s32 %s108, %s41
      %s110 = ssub.s32 %s107, %s109
      %p111 = scmp.eq.s32.totalorder %s110, 0
      %s113 = sadd.s32 %s112, 1
      %s114 = scalar_select %p111, %s112, %s113
      %p117 = pneg %p111
      %p118 = scmp.eq.s32.totalorder %s26, 1
      %p119 = por %p117, %p118
      %p120 = scmp.ne.s32.totalorder %s112, %s115
      %p121 = scmp.eq.s32.totalorder %s26, 0
      %p122 = por %p120, %p121
      %p123 = scmp.ne.s32.totalorder %s112, %s115
      %p124 = scmp.eq.s32.totalorder %s31, 1
      %p125 = por %p123, %p124
      %p126 = scmp.ne.s32.totalorder %s115, %s116
      %p127 = scmp.eq.s32.totalorder %s31, 0
      %p128 = por %p126, %p127
      %p129 = scmp.ne.s32.totalorder %s115, %s116
      %p130 = scmp.eq.s32.totalorder %s32, 1
      %p131 = por %p129, %p130
      %p133 = scmp.ne.s32.totalorder %s116, %s132
      %p134 = scmp.eq.s32.totalorder %s32, 0
      %p135 = por %p133, %p134
      %s136 = smul.u32 %s33, 2
      %s137 = sadd.s32 %s136, %s34
      %s138 = smul.u32 %s45, 2
      %s139 = sadd.s32 %s138, %s41
      %s140 = ssub.s32 %s137, %s139
      %p141 = scmp.eq.s32.totalorder %s140, 0
      %s143 = sadd.s32 %s142, 1
      %s144 = scalar_select %p141, %s142, %s143
      %p147 = pneg %p141
      %p148 = scmp.eq.s32.totalorder %s26, 1
      %p149 = por %p147, %p148
      %p150 = scmp.ne.s32.totalorder %s142, %s145
      %p151 = scmp.eq.s32.totalorder %s26, 0
      %p152 = por %p150, %p151
      %p153 = scmp.ne.s32.totalorder %s142, %s145
      %p154 = scmp.eq.s32.totalorder %s31, 1
      %p155 = por %p153, %p154
      %p156 = scmp.ne.s32.totalorder %s145, %s146
      %p157 = scmp.eq.s32.totalorder %s31, 0
      %p158 = por %p156, %p157
      %p159 = scmp.ne.s32.totalorder %s145, %s146
      %p160 = scmp.eq.s32.totalorder %s32, 1
      %p161 = por %p159, %p160
      %p163 = scmp.ne.s32.totalorder %s146, %s162
      %p164 = scmp.eq.s32.totalorder %s32, 0
      %p165 = por %p163, %p164
      %s166 = smul.u32 %s33, 2
      %s167 = sadd.s32 %s166, %s34
      %s168 = smul.u32 %s45, 2
      %s169 = sadd.s32 %s168, %s41
      %s170 = ssub.s32 %s167, %s169
      %p171 = scmp.eq.s32.totalorder %s170, 0
      %s173 = sadd.s32 %s172, 1
      %s174 = scalar_select %p171, %s172, %s173
      %p177 = pneg %p171
      %p178 = scmp.eq.s32.totalorder %s26, 1
      %p179 = por %p177, %p178
      %p180 = scmp.ne.s32.totalorder %s172, %s175
      %p181 = scmp.eq.s32.totalorder %s26, 0
      %p182 = por %p180, %p181
      %p183 = scmp.ne.s32.totalorder %s172, %s175
      %p184 = scmp.eq.s32.totalorder %s31, 1
      %p185 = por %p183, %p184
      %p186 = scmp.ne.s32.totalorder %s175, %s176
      %p187 = scmp.eq.s32.totalorder %s31, 0
      %p188 = por %p186, %p187
      %p189 = scmp.ne.s32.totalorder %s175, %s176
      %p190 = scmp.eq.s32.totalorder %s32, 1
      %p191 = por %p189, %p190
      %p193 = scmp.ne.s32.totalorder %s176, %s192
      %p194 = scmp.eq.s32.totalorder %s32, 0
      %p195 = por %p193, %p194
      %s197 = sadd.s32 %s196, 1
      %p200 = scmp.eq.s32.totalorder %s26, 1
      %p201 = scmp.ne.s32.totalorder %s196, %s198
      %p202 = scmp.eq.s32.totalorder %s26, 0
      %p203 = por %p201, %p202
      %p204 = scmp.ne.s32.totalorder %s196, %s198
      %p205 = scmp.eq.s32.totalorder %s31, 1
      %p206 = por %p204, %p205
      %p207 = scmp.ne.s32.totalorder %s198, %s199
      %p208 = scmp.eq.s32.totalorder %s31, 0
      %p209 = por %p207, %p208
      %p210 = scmp.ne.s32.totalorder %s198, %s199
      %p211 = scmp.eq.s32.totalorder %s32, 1
      %p212 = por %p210, %p211
      %p214 = scmp.ne.s32.totalorder %s199, %s213
      %p215 = scmp.eq.s32.totalorder %s32, 0
      %p216 = por %p214, %p215
      %s218 = sadd.s32 %s217, 1
      %p221 = scmp.eq.s32.totalorder %s26, 1
      %p222 = scmp.ne.s32.totalorder %s217, %s219
      %p223 = scmp.eq.s32.totalorder %s26, 0
      %p224 = por %p222, %p223
      %p225 = scmp.ne.s32.totalorder %s217, %s219
      %p226 = scmp.eq.s32.totalorder %s31, 1
      %p227 = por %p225, %p226
      %p228 = scmp.ne.s32.totalorder %s219, %s220
      %p229 = scmp.eq.s32.totalorder %s31, 0
      %p230 = por %p228, %p229
      %p231 = scmp.ne.s32.totalorder %s219, %s220
      %p232 = scmp.eq.s32.totalorder %s32, 1
      %p233 = por %p231, %p232
      %p235 = scmp.ne.s32.totalorder %s220, %s234
      %p236 = scmp.eq.s32.totalorder %s32, 0
      %p237 = por %p235, %p236
      %s239 = sadd.s32 %s238, 1
      %p242 = scmp.eq.s32.totalorder %s26, 1
      %p243 = scmp.ne.s32.totalorder %s238, %s240
      %p244 = scmp.eq.s32.totalorder %s26, 0
      %p245 = por %p243, %p244
      %p246 = scmp.ne.s32.totalorder %s238, %s240
      %p247 = scmp.eq.s32.totalorder %s31, 1
      %p248 = por %p246, %p247
      %p249 = scmp.ne.s32.totalorder %s240, %s241
      %p250 = scmp.eq.s32.totalorder %s31, 0
      %p251 = por %p249, %p250
      %p252 = scmp.ne.s32.totalorder %s240, %s241
      %p253 = scmp.eq.s32.totalorder %s32, 1
      %p254 = por %p252, %p253
      %p256 = scmp.ne.s32.totalorder %s241, %s255
      %p257 = scmp.eq.s32.totalorder %s32, 0
      %p258 = por %p256, %p257
      %s260 = sadd.s32 %s259, 1
      %p263 = scmp.eq.s32.totalorder %s26, 1
      %p264 = scmp.ne.s32.totalorder %s259, %s261
      %p265 = scmp.eq.s32.totalorder %s26, 0
      %p266 = por %p264, %p265
      %p267 = scmp.ne.s32.totalorder %s259, %s261
      %p268 = scmp.eq.s32.totalorder %s31, 1
      %p269 = por %p267, %p268
      %p270 = scmp.ne.s32.totalorder %s261, %s262
      %p271 = scmp.eq.s32.totalorder %s31, 0
      %p272 = por %p270, %p271
      %p273 = scmp.ne.s32.totalorder %s261, %s262
      %p274 = scmp.eq.s32.totalorder %s32, 1
      %p275 = por %p273, %p274
      %p277 = scmp.ne.s32.totalorder %s262, %s276
      %p278 = scmp.eq.s32.totalorder %s32, 0
      %p279 = por %p277, %p278
      %s281 = sadd.s32 %s280, 1
      %p284 = scmp.eq.s32.totalorder %s26, 1
      %p285 = scmp.ne.s32.totalorder %s280, %s282
      %p286 = scmp.eq.s32.totalorder %s26, 0
      %p287 = por %p285, %p286
      %p288 = scmp.ne.s32.totalorder %s280, %s282
      %p289 = scmp.eq.s32.totalorder %s31, 1
      %p290 = por %p288, %p289
      %p291 = scmp.ne.s32.totalorder %s282, %s283
      %p292 = scmp.eq.s32.totalorder %s31, 0
      %p293 = por %p291, %p292
      %p294 = scmp.ne.s32.totalorder %s282, %s283
      %p295 = scmp.eq.s32.totalorder %s32, 1
      %p296 = por %p294, %p295
      %p298 = scmp.ne.s32.totalorder %s283, %s297
      %p299 = scmp.eq.s32.totalorder %s32, 0
      %p300 = por %p298, %p299
      %s302 = sadd.s32 %s301, 1
      %p305 = scmp.eq.s32.totalorder %s26, 1
      %p306 = scmp.ne.s32.totalorder %s301, %s303
      %p307 = scmp.eq.s32.totalorder %s26, 0
      %p308 = por %p306, %p307
      %p309 = scmp.ne.s32.totalorder %s301, %s303
      %p310 = scmp.eq.s32.totalorder %s31, 1
      %p311 = por %p309, %p310
      %p312 = scmp.ne.s32.totalorder %s303, %s304
      %p313 = scmp.eq.s32.totalorder %s31, 0
      %p314 = por %p312, %p313
      %p315 = scmp.ne.s32.totalorder %s303, %s304
      %p316 = scmp.eq.s32.totalorder %s32, 1
      %p317 = por %p315, %p316
      %p319 = scmp.ne.s32.totalorder %s304, %s318
      %p320 = scmp.eq.s32.totalorder %s32, 0
      %p321 = por %p319, %p320
      %s323 = sadd.s32 %s322, 1
      %p326 = scmp.eq.s32.totalorder %s26, 1
      %p327 = scmp.ne.s32.totalorder %s322, %s324
      %p328 = scmp.eq.s32.totalorder %s26, 0
      %p329 = por %p327, %p328
      %p330 = scmp.ne.s32.totalorder %s322, %s324
      %p331 = scmp.eq.s32.totalorder %s31, 1
      %p332 = por %p330, %p331
      %p333 = scmp.ne.s32.totalorder %s324, %s325
      %p334 = scmp.eq.s32.totalorder %s31, 0
      %p335 = por %p333, %p334
      %p336 = scmp.ne.s32.totalorder %s324, %s325
      %p337 = scmp.eq.s32.totalorder %s32, 1
      %p338 = por %p336, %p337
      %p340 = scmp.ne.s32.totalorder %s325, %s339
      %p341 = scmp.eq.s32.totalorder %s32, 0
      %p342 = por %p340, %p341
      %s343 = ssub.s32 %s33, %s45
      %p344 = scmp.eq.s32.totalorder %s343, 0
      %s346 = sadd.s32 %s345, 1
      %s347 = scalar_select %p344, %s345, %s346
      %p350 = pneg %p344
      %p351 = scmp.eq.s32.totalorder %s26, 1
      %p352 = por %p350, %p351
      %p353 = scmp.ne.s32.totalorder %s345, %s348
      %p354 = scmp.eq.s32.totalorder %s26, 0
      %p355 = por %p353, %p354
      %p356 = scmp.ne.s32.totalorder %s345, %s348
      %p357 = scmp.eq.s32.totalorder %s31, 1
      %p358 = por %p356, %p357
      %p359 = scmp.ne.s32.totalorder %s348, %s349
      %p360 = scmp.eq.s32.totalorder %s31, 0
      %p361 = por %p359, %p360
      %p362 = scmp.ne.s32.totalorder %s348, %s349
      %p363 = scmp.eq.s32.totalorder %s32, 1
      %p364 = por %p362, %p363
      %p366 = scmp.ne.s32.totalorder %s349, %s365
      %p367 = scmp.eq.s32.totalorder %s32, 0
      %p368 = por %p366, %p367
      %s369 = ssub.s32 %s33, %s45
      %p370 = scmp.eq.s32.totalorder %s369, 0
      %s372 = sadd.s32 %s371, 1
      %s373 = scalar_select %p370, %s371, %s372
      %p376 = pneg %p370
      %p377 = scmp.eq.s32.totalorder %s26, 1
      %p378 = por %p376, %p377
      %p379 = scmp.ne.s32.totalorder %s371, %s374
      %p380 = scmp.eq.s32.totalorder %s26, 0
      %p381 = por %p379, %p380
      %p382 = scmp.ne.s32.totalorder %s371, %s374
      %p383 = scmp.eq.s32.totalorder %s31, 1
      %p384 = por %p382, %p383
      %p385 = scmp.ne.s32.totalorder %s374, %s375
      %p386 = scmp.eq.s32.totalorder %s31, 0
      %p387 = por %p385, %p386
      %p388 = scmp.ne.s32.totalorder %s374, %s375
      %p389 = scmp.eq.s32.totalorder %s32, 1
      %p390 = por %p388, %p389
      %p392 = scmp.ne.s32.totalorder %s375, %s391
      %p393 = scmp.eq.s32.totalorder %s32, 0
      %p394 = por %p392, %p393
      %s395 = ssub.s32 %s33, %s45
      %p396 = scmp.eq.s32.totalorder %s395, 0
      %s398 = sadd.s32 %s397, 1
      %s399 = scalar_select %p396, %s397, %s398
      %p402 = pneg %p396
      %p403 = scmp.eq.s32.totalorder %s26, 1
      %p404 = por %p402, %p403
      %p405 = scmp.ne.s32.totalorder %s397, %s400
      %p406 = scmp.eq.s32.totalorder %s26, 0
      %p407 = por %p405, %p406
      %p408 = scmp.ne.s32.totalorder %s397, %s400
      %p409 = scmp.eq.s32.totalorder %s31, 1
      %p410 = por %p408, %p409
      %p411 = scmp.ne.s32.totalorder %s400, %s401
      %p412 = scmp.eq.s32.totalorder %s31, 0
      %p413 = por %p411, %p412
      %p414 = scmp.ne.s32.totalorder %s400, %s401
      %p415 = scmp.eq.s32.totalorder %s32, 1
      %p416 = por %p414, %p415
      %p418 = scmp.ne.s32.totalorder %s401, %s417
      %p419 = scmp.eq.s32.totalorder %s32, 0
      %p420 = por %p418, %p419
      %s421 = smul.u32 %s33, 2
      %s422 = sadd.s32 %s421, %s34
      %s423 = smul.u32 %s45, 2
      %s424 = sadd.s32 %s423, %s41
      %s425 = ssub.s32 %s422, %s424
      %p426 = scmp.eq.s32.totalorder %s425, 0
      %s428 = sadd.s32 %s427, 1
      %s429 = scalar_select %p426, %s427, %s428
      %p432 = pneg %p426
      %p433 = scmp.eq.s32.totalorder %s26, 1
      %p434 = por %p432, %p433
      %p435 = scmp.ne.s32.totalorder %s427, %s430
      %p436 = scmp.eq.s32.totalorder %s26, 0
      %p437 = por %p435, %p436
      %p438 = scmp.ne.s32.totalorder %s427, %s430
      %p439 = scmp.eq.s32.totalorder %s31, 1
      %p440 = por %p438, %p439
      %p441 = scmp.ne.s32.totalorder %s430, %s431
      %p442 = scmp.eq.s32.totalorder %s31, 0
      %p443 = por %p441, %p442
      %p444 = scmp.ne.s32.totalorder %s430, %s431
      %p445 = scmp.eq.s32.totalorder %s32, 1
      %p446 = por %p444, %p445
      %p448 = scmp.ne.s32.totalorder %s431, %s447
      %p449 = scmp.eq.s32.totalorder %s32, 0
      %p450 = por %p448, %p449
      %p451 = scmp.le.s32.totalorder 1, %s26
      %p452 = scmp.lt.s32.totalorder %s26, 3
      %p453 = pnand %p451, %p452
      %p454 = pneg %p453
      // Predicated region
      $region9: #{tpu_custom_call.1} parent=5 // pred_check
        _
      $region10: #{tpu_custom_call.1} parent=5 // pred_check_branch
        %456 = sbr.rel (%p453) target = $region12
      $region11: #{tpu_custom_call.1} parent=5 // pred_region
        %s457 = ssub.s32 %s26, 1
        // Predicated region
        $region13: #{tpu_custom_call.1} parent=11 // pred_check
          %p458 = pneg %p209
        $region14: #{tpu_custom_call.1} parent=11 // pred_check_branch
          %460 = sbr.rel (%p458) target = $region16
        $region15: #{tpu_custom_call.1} parent=11 // pred_region
          _
        $region16: #{tpu_custom_call.1} parent=11 // pred_fallthru
          _
        // Predicated region
        $region17: #{tpu_custom_call.1} parent=11 // pred_check
          %p461 = pneg %p230
        $region18: #{tpu_custom_call.1} parent=11 // pred_check_branch
          %463 = sbr.rel (%p461) target = $region20
        $region19: #{tpu_custom_call.1} parent=11 // pred_region
          _
        $region20: #{tpu_custom_call.1} parent=11 // pred_fallthru
          _
        // Predicated region
        $region21: #{tpu_custom_call.1} parent=11 // pred_check
          %p464 = pneg %p251
        $region22: #{tpu_custom_call.1} parent=11 // pred_check_branch
          %466 = sbr.rel (%p464) target = $region24
        $region23: #{tpu_custom_call.1} parent=11 // pred_region
          _
        $region24: #{tpu_custom_call.1} parent=11 // pred_fallthru
          _
        // Predicated region
        $region25: #{tpu_custom_call.1} parent=11 // pred_check
          %p467 = pneg %p272
        $region26: #{tpu_custom_call.1} parent=11 // pred_check_branch
          %469 = sbr.rel (%p467) target = $region28
        $region27: #{tpu_custom_call.1} parent=11 // pred_region
          _
        $region28: #{tpu_custom_call.1} parent=11 // pred_fallthru
          _
        // Predicated region
        $region29: #{tpu_custom_call.1} parent=11 // pred_check
          %p470 = pneg %p293
        $region30: #{tpu_custom_call.1} parent=11 // pred_check_branch
          %472 = sbr.rel (%p470) target = $region32
        $region31: #{tpu_custom_call.1} parent=11 // pred_region
          _
        $region32: #{tpu_custom_call.1} parent=11 // pred_fallthru
          _
        // Predicated region
        $region33: #{tpu_custom_call.1} parent=11 // pred_check
          %p473 = pneg %p314
        $region34: #{tpu_custom_call.1} parent=11 // pred_check_branch
          %475 = sbr.rel (%p473) target = $region36
        $region35: #{tpu_custom_call.1} parent=11 // pred_region
          _
        $region36: #{tpu_custom_call.1} parent=11 // pred_fallthru
          _
        // Predicated region
        $region37: #{tpu_custom_call.1} parent=11 // pred_check
          %p476 = pneg %p335
        $region38: #{tpu_custom_call.1} parent=11 // pred_check_branch
          %478 = sbr.rel (%p476) target = $region40
        $region39: #{tpu_custom_call.1} parent=11 // pred_region
          _
        $region40: #{tpu_custom_call.1} parent=11 // pred_fallthru
          _
      $region12: #{tpu_custom_call.1} parent=5 // pred_fallthru
        _
      %p479 = scmp.lt.s32.totalorder %s26, 2
      // Predicated region
      $region41: #{tpu_custom_call.1} parent=5 // pred_check
        %p480 = pneg %p479
      $region42: #{tpu_custom_call.1} parent=5 // pred_check_branch
        %482 = sbr.rel (%p480) target = $region44
      $region43: #{tpu_custom_call.1} parent=5 // pred_region
        // Predicated region
        $region45: #{tpu_custom_call.1} parent=43 // pred_check
          %p483 = pneg %p62
        $region46: #{tpu_custom_call.1} parent=43 // pred_check_branch
          %485 = sbr.rel (%p483) target = $region48
        $region47: #{tpu_custom_call.1} parent=43 // pred_region
          %s486 = smul.u32 %s33, 2
          %s487 = sadd.s32 %s486, %s34
          %p488 = scmp.lt.s32.totalorder %s487, 1
          %s489 = scalar_select %p488, %s487, 1
          %s490 = smul.addr %s489, 8
          %s491 = scalar_lea.vmem %s0, %s490
          %s492 = smul.u32 %s33, 2
          %s493 = sadd.s32 %s492, %s34
        $region48: #{tpu_custom_call.1} parent=43 // pred_fallthru
          _
        // Predicated region
        $region49: #{tpu_custom_call.1} parent=43 // pred_check
          %p494 = pneg %p92
        $region50: #{tpu_custom_call.1} parent=43 // pred_check_branch
          %496 = sbr.rel (%p494) target = $region52
        $region51: #{tpu_custom_call.1} parent=43 // pred_region
          %s497 = smul.u32 %s33, 2
          %s498 = sadd.s32 %s497, %s34
          %p499 = scmp.lt.s32.totalorder %s498, 1
          %s500 = scalar_select %p499, %s498, 1
          %s501 = smul.addr %s500, 8
          %s502 = scalar_lea.vmem %s1, %s501
          %s503 = smul.u32 %s33, 2
          %s504 = sadd.s32 %s503, %s34
        $region52: #{tpu_custom_call.1} parent=43 // pred_fallthru
          _
        // Predicated region
        $region53: #{tpu_custom_call.1} parent=43 // pred_check
          %p505 = pneg %p122
        $region54: #{tpu_custom_call.1} parent=43 // pred_check_branch
          %507 = sbr.rel (%p505) target = $region56
        $region55: #{tpu_custom_call.1} parent=43 // pred_region
          %s508 = smul.u32 %s33, 2
          %s509 = sadd.s32 %s508, %s34
          %p510 = scmp.lt.s32.totalorder %s509, 1
          %s511 = scalar_select %p510, %s509, 1
          %s512 = smul.addr %s511, 8
          %s513 = scalar_lea.vmem %s2, %s512
          %s514 = smul.u32 %s33, 2
          %s515 = sadd.s32 %s514, %s34
        $region56: #{tpu_custom_call.1} parent=43 // pred_fallthru
          _
        // Predicated region
        $region57: #{tpu_custom_call.1} parent=43 // pred_check
          %p516 = pneg %p152
        $region58: #{tpu_custom_call.1} parent=43 // pred_check_branch
          %518 = sbr.rel (%p516) target = $region60
        $region59: #{tpu_custom_call.1} parent=43 // pred_region
          %s519 = smul.u32 %s33, 2
          %s520 = sadd.s32 %s519, %s34
          %p521 = scmp.lt.s32.totalorder %s520, 1
          %s522 = scalar_select %p521, %s520, 1
          %s523 = scalar_lea.vmem %s3, %s522
          %s524 = smul.u32 %s33, 2
          %s525 = sadd.s32 %s524, %s34
        $region60: #{tpu_custom_call.1} parent=43 // pred_fallthru
          _
        // Predicated region
        $region61: #{tpu_custom_call.1} parent=43 // pred_check
          %p526 = pneg %p182
        $region62: #{tpu_custom_call.1} parent=43 // pred_check_branch
          %528 = sbr.rel (%p526) target = $region64
        $region63: #{tpu_custom_call.1} parent=43 // pred_region
          %s529 = smul.u32 %s33, 2
          %s530 = sadd.s32 %s529, %s34
          %p531 = scmp.lt.s32.totalorder %s530, 1
          %s532 = scalar_select %p531, %s530, 1
          %s533 = smul.addr %s532, 4
          %s534 = scalar_lea.vmem %s4, %s533
          %s535 = smul.u32 %s33, 2
          %s536 = sadd.s32 %s535, %s34
        $region64: #{tpu_custom_call.1} parent=43 // pred_fallthru
          _
      $region44: #{tpu_custom_call.1} parent=5 // pred_fallthru
        _
      %p537 = scmp.le.s32.totalorder 1, %s26
      %p538 = scmp.lt.s32.totalorder %s26, 3
      %p539 = pnand %p537, %p538
      %p540 = pneg %p539
      // Predicated region
      $region65: #{tpu_custom_call.1} parent=5 // pred_check
        _
      $region66: #{tpu_custom_call.1} parent=5 // pred_check_branch
        %542 = sbr.rel (%p539) target = $region68
      $region67: #{tpu_custom_call.1} parent=5 // pred_region
        %s543 = ssub.s32 %s26, 1
        %s544 = smul.u32 %s35, 2
        %s545 = sadd.s32 %s544, %s36
        %p546 = scmp.lt.s32.totalorder %s545, 1
        %s547 = scalar_select %p546, %s545, 1
        %s548 = smul.addr %s547, 8
        %s549 = scalar_lea.vmem %s0, %s548
        %p550 = pneg %p68
        %p551 = pneg %p65
        %s552 = smul.u32 %s35, 2
        %s553 = sadd.s32 %s552, %s36
        %p554 = scmp.lt.s32.totalorder %s553, 1
        %s555 = scalar_select %p554, %s553, 1
        %s556 = smul.addr %s555, 8
        %s557 = scalar_lea.vmem %s1, %s556
        %p558 = pneg %p98
        %p559 = pneg %p95
        %s560 = smul.u32 %s35, 2
        %s561 = sadd.s32 %s560, %s36
        %p562 = scmp.lt.s32.totalorder %s561, 1
        %s563 = scalar_select %p562, %s561, 1
        %s564 = smul.addr %s563, 8
        %s565 = scalar_lea.vmem %s2, %s564
        %p566 = pneg %p128
        %p567 = pneg %p125
        %s568 = smul.u32 %s35, 2
        %s569 = sadd.s32 %s568, %s36
        %p570 = scmp.lt.s32.totalorder %s569, 1
        %s571 = scalar_select %p570, %s569, 1
        %s572 = scalar_lea.vmem %s3, %s571
        %p573 = pneg %p158
        %p574 = pneg %p155
        %s575 = smul.u32 %s35, 2
        %s576 = sadd.s32 %s575, %s36
        %p577 = scmp.lt.s32.totalorder %s576, 1
        %s578 = scalar_select %p577, %s576, 1
        %s579 = smul.addr %s578, 4
        %s580 = scalar_lea.vmem %s4, %s579
        %p581 = pneg %p188
        %p582 = pneg %p185
        %p583 = pneg %p209
        %p584 = pneg %p206
        %p585 = pneg %p230
        %p586 = pneg %p227
        %p587 = pneg %p251
        %p588 = pneg %p248
        %p589 = pneg %p272
        %p590 = pneg %p269
        %p591 = pneg %p293
        %p592 = pneg %p290
        %p593 = pneg %p314
        %p594 = pneg %p311
        %p595 = pneg %p335
        %p596 = pneg %p332
        %p597 = pneg %p361
        %p598 = pneg %p358
        %p599 = pneg %p387
        %p600 = pneg %p384
        %p601 = pneg %p413
        %p602 = pneg %p410
        %p603 = pneg %p443
        %p604 = pneg %p440
        %s605 = smul.u32 %s35, 2
        %s606 = sadd.s32 %s605, %s36
        %p607 = scmp.lt.s32.totalorder %s606, 1
        %s608 = scalar_select %p607, %s606, 1
        %s609 = smul.addr %s608, 8
        %s610 = scalar_lea.vmem %s15, %s609
        %s611 = smul.u32 %s35, 2
        %s612 = sadd.s32 %s611, %s36
        %p613 = scmp.lt.s32.totalorder %s612, 1
        %s614 = scalar_select %p613, %s612, 1
        %s615 = smul.addr %s614, 8
        %s616 = scalar_lea.vmem %s0, %s615
        %s617 = smul.u32 %s35, 2
        %s618 = sadd.s32 %s617, %s36
        %s619 = smul.u32 %s35, 2
        %s620 = sadd.s32 %s619, %s36
        %p621 = scmp.lt.s32.totalorder %s620, 1
        %s622 = scalar_select %p621, %s620, 1
        %s623 = smul.addr %s622, 8
        %s624 = scalar_lea.vmem %s1, %s623
        %s625 = smul.u32 %s35, 2
        %s626 = sadd.s32 %s625, %s36
        %s627 = smul.u32 %s35, 2
        %s628 = sadd.s32 %s627, %s36
        %p629 = scmp.lt.s32.totalorder %s628, 1
        %s630 = scalar_select %p629, %s628, 1
        %s631 = smul.addr %s630, 8
        %s632 = scalar_lea.vmem %s2, %s631
        %s633 = smul.u32 %s35, 2
        %s634 = sadd.s32 %s633, %s36
        %s635 = smul.u32 %s35, 2
        %s636 = sadd.s32 %s635, %s36
        %p637 = scmp.lt.s32.totalorder %s636, 1
        %s638 = scalar_select %p637, %s636, 1
        %s639 = scalar_lea.vmem %s3, %s638
        %s640 = smul.u32 %s35, 2
        %s641 = sadd.s32 %s640, %s36
        %s642 = smul.u32 %s35, 2
        %s643 = sadd.s32 %s642, %s36
        %p644 = scmp.lt.s32.totalorder %s643, 1
        %s645 = scalar_select %p644, %s643, 1
        %s646 = smul.addr %s645, 4
        %s647 = scalar_lea.vmem %s4, %s646
        %s648 = smul.u32 %s35, 2
        %s649 = sadd.s32 %s648, %s36
        %s650 = smul.u32 %s35, 2
        %s651 = sadd.s32 %s650, %s36
        %p652 = scmp.lt.s32.totalorder %s651, 1
        %s653 = scalar_select %p652, %s651, 1
        %s654 = smul.addr %s653, 8
        %s655 = scalar_lea.vmem %s15, %s654
        %s656 = smul.u32 %s35, 2
        %s657 = sadd.s32 %s656, %s36
        %s659 = smul.u32 %s35, 2
        %s660 = sadd.s32 %s659, %s36
        %p661 = scmp.eq.s32.totalorder %s36, 0
        // Predicated region
        $region69: #{tpu_custom_call.1} parent=67 // pred_check
          %p662 = pneg %p661
        $region70: #{tpu_custom_call.1} parent=67 // pred_check_branch
          %664 = sbr.rel (%p662) target = $region72
        $region71: #{tpu_custom_call.1} parent=67 // pred_region
          %665 = vst [vmem:[#allocation3] sm:$0x1] 0.0
          %vm666 = vcmask 253952
          %667 = vst.msk [vmem:[#allocation5] sm:$0x1] %vm666, 0.0
          %vm668 = vcmask 261120
          %669 = vst.msk [vmem:[#allocation7] sm:$0xff] %vm668, 0.0
          %670 = vst.msk [vmem:[#allocation7 + $0x8] sm:$0xff] %vm668, 0.0
          %671 = vst.msk [vmem:[#allocation7 + $0x10] sm:$0xff] %vm668, 0.0
          %672 = vst.msk [vmem:[#allocation7 + $0x18] sm:$0xff] %vm668, 0.0
        $region72: #{tpu_custom_call.1} parent=67 // pred_fallthru
          _
        %v673 = vld [vmem:[%s616] sm:$0xff]
        %v674 = vld [vmem:[%s624] sm:$0xff]
        %v675 = vld [vmem:[%s632] sm:$0xff]
        %v676 = vld [vmem:[%s639] sm:$0x1]
        %v677 = vmul.f32 %v673, 2.0
        %v678 = vsub.f32 %v674, %v677
        %v679 = vmul.f32 %v674, %v678
        %vm680 = vcmask 261120
        %v681 = vsel %vm680, %v679, 0.0
        %682 = vadd.xlane.f32.xlu0 %v681
        %v683 = vpop.xlane.xlu0 %682
        %685 = vrot.lane.b32.xlu0 %v673, 32
        %v686 = vpop.permute.xlu0 %685
        %688 = vrot.lane.b32.xlu0 %v673, 64
        %v689 = vpop.permute.xlu0 %688
        %691 = vrot.lane.b32.xlu0 %v673, 96
        %v692 = vpop.permute.xlu0 %691
        %v694 = vsel %vm680, %v673, %v686
        %vm695 = vcmask 523264
        %v696 = vsel %vm695, %v694, %v689
        %vm697 = vcmask 785408
        %v698 = vsel %vm697, %v696, %v692
        %v699 = vmul.f32 %v698, 2.0
        %v700 = vsub.f32 %v675, %v699
        %v701 = vmul.f32 %v675, %v700
        %v702 = vld [vmem:[%s5] sm:$0xff]
        %v703 = vld [vmem:[%s5 + $0x8] sm:$0xff]
        %v704 = vld [vmem:[%s5 + $0x10] sm:$0xff]
        %v705 = vld [vmem:[%s5 + $0x18] sm:$0xff]
        %v706 = vld [vmem:[%s5 + $0x20] sm:$0xff]
        %v707 = vld [vmem:[%s5 + $0x28] sm:$0xff]
        %v708 = vld [vmem:[%s5 + $0x30] sm:$0xff]
        %v709 = vld [vmem:[%s5 + $0x38] sm:$0xff]
        %v710 = vld [vmem:[%s5 + $0x40] sm:$0xff]
        %v711 = vld [vmem:[%s5 + $0x48] sm:$0xff]
        %v712 = vld [vmem:[%s5 + $0x50] sm:$0xff]
        %v713 = vld [vmem:[%s5 + $0x58] sm:$0xff]
        %v714 = vld [vmem:[%s5 + $0x60] sm:$0xff]
        %v715 = vld [vmem:[%s5 + $0x68] sm:$0xff]
        %v716 = vld [vmem:[%s5 + $0x70] sm:$0xff]
        %v717 = vld [vmem:[%s5 + $0x78] sm:$0xff]
        %718 = vmatpush.msra.mxu0 %v717
        %719 = vmatpush.msra.mxu0 %v716
        %720 = vmatpush.msra.mxu0 %v715
        %721 = vmatpush.msra.mxu0 %v714
        %722 = vmatpush.msra.mxu0 %v713
        %723 = vmatpush.msra.mxu0 %v712
        %724 = vmatpush.msra.mxu0 %v711
        %725 = vmatpush.msra.mxu0 %v710
        %726 = vmatpush.msra.mxu0 %v709
        %727 = vmatpush.msra.mxu0 %v708
        %728 = vmatpush.msra.mxu0 %v707
        %729 = vmatpush.msra.mxu0 %v706
        %730 = vmatpush.msra.mxu0 %v705
        %731 = vmatpush.msra.mxu0 %v704
        %732 = vmatpush.msra.mxu0 %v703
        %733 = vmatpush.msra.mxu0 %v702
        %734 = vmatmul.f32.gmra.mxu0 %v701
        %v735 = vpop.f32.mrf.mxu0
        %v736 = vadd.f32 0.0, %v735
        %737 = vdwg.mxu0
        %v738 = vsub.f32 %v683, %v736
        %v739 = vadd.f32 %v738, 0.5
        %v740 = vmax.f32 %v739, 0.0
        %vm741 = vcmask 64512
        %v743 = vsel %vm741, %v676, 0
        %745 = vmatpush.msra.mxu0 0.0
        %746 = vmatpush.msra.mxu0 0.0
        %747 = vmatpush.msra.mxu0 0.0
        %748 = vmatpush.msra.mxu0 0.0
        %749 = vmatpush.msra.mxu0 0.0
        %750 = vmatpush.msra.mxu0 0.0
        %751 = vmatpush.msra.mxu0 0.0
        %752 = vmatpush.msra.mxu0 0.0
        %753 = vmatpush.msra.mxu0 0.0
        %754 = vmatpush.msra.mxu0 0.0
        %755 = vmatpush.msra.mxu0 0.0
        %756 = vmatpush.msra.mxu0 0.0
        %757 = vmatpush.msra.mxu0 0.0
        %758 = vmatpush.msra.mxu0 0.0
        %759 = vmatpush.msra.mxu0 0.0
        %760 = vmatpush.msra.mxu0 %v740
        %761 = vmatmul.f32.gmra.mxu0 %v743
        %v762 = vpop.f32.mrf.mxu0
        %v763 = vadd.f32 0.0, %v762
        %764 = vdwg.mxu0
        %vm765 = vcmask 24576
        %v766 = vsel %vm765, %v763, 0.0
        %767 = vadd.xlane.f32.xlu0 %v766
        %v768 = vpop.xlane.xlu0 %767
        %v769 = vrot.slane %v768, 4
        %v770 = vadd.f32 %v768, %v769
        %v771 = vrot.slane %v770, 2
        %v772 = vadd.f32 %v770, %v771
        %v773 = vrot.slane %v772, 1
        %v774 = vadd.f32 %v772, %v773
        %s775 = vtos %v774
        %v776 = vlaneseq
        %v777 = vshrl.u32 %v776, 7
        %s778 = smul.u32 %s660, 8
        %v779 = vstv %s778
        %v780 = vadd.s32 %v777, %v779
        %vm781 = vcmp.lt.s32.totalorder %v780, 16
        %v782 = vsel %vm781, 1, 0
        %v783 = vcvt.s32.f32 %v782
        %v784 = vld [vmem:[%s647] sm:$0xf]
        %v785 = vld [vmem:[%s6] sm:$0xff]
        %v786 = vld [vmem:[%s6 + $0x8] sm:$0xff]
        %v787 = vld [vmem:[%s6 + $0x10] sm:$0xff]
        %v788 = vld [vmem:[%s6 + $0x18] sm:$0xff]
        %v789 = vld [vmem:[%s6 + $0x20] sm:$0xff]
        %v790 = vld [vmem:[%s6 + $0x28] sm:$0xff]
        %v791 = vld [vmem:[%s6 + $0x30] sm:$0xff]
        %v792 = vld [vmem:[%s6 + $0x38] sm:$0xff]
        %v793 = vld [vmem:[%s7] sm:$0x3]
        %v795 = vperm.slane %v793, 0
        %v796 = vperm.slane %v793, 1
        %v807 = vunpack.c.l.b16 %v785
        %v808 = vunpack.c.h.b16 %v785
        %v809 = vunpack.c.l.b16 %v786
        %v810 = vunpack.c.h.b16 %v786
        %v811 = vunpack.c.l.b16 %v787
        %v812 = vunpack.c.h.b16 %v787
        %v813 = vunpack.c.l.b16 %v788
        %v814 = vunpack.c.h.b16 %v788
        %v815 = vunpack.c.l.b16 %v789
        %v816 = vunpack.c.h.b16 %v789
        %v817 = vunpack.c.l.b16 %v790
        %v818 = vunpack.c.h.b16 %v790
        %v819 = vunpack.c.l.b16 %v791
        %v820 = vunpack.c.h.b16 %v791
        %v821 = vunpack.c.l.b16 %v792
        %v822 = vunpack.c.h.b16 %v792
        %v823 = vpack.c.b16 %v809, %v807
        %v824 = vpack.c.b16 %v810, %v808
        %v825 = vpack.c.b16 %v813, %v811
        %v826 = vpack.c.b16 %v814, %v812
        %v827 = vpack.c.b16 %v817, %v815
        %v828 = vpack.c.b16 %v818, %v816
        %v829 = vpack.c.b16 %v821, %v819
        %v830 = vpack.c.b16 %v822, %v820
        %v840 = vsel %vm695, %v784, 0
        %842 = vmatpush.bf16.msra.mxu0 0
        %843 = vmatpush.bf16.msra.mxu0 0
        %844 = vmatpush.bf16.msra.mxu0 0
        %845 = vmatpush.bf16.msra.mxu0 0
        %846 = vmatpush.bf16.msra.mxu0 %v829
        %847 = vmatpush.bf16.msra.mxu0 %v827
        %848 = vmatpush.bf16.msra.mxu0 %v825
        %849 = vmatpush.bf16.msra.mxu0 %v823
        %850 = vmatmul.bf16.gmra.mxu0 %v840
        %v851 = vpop.f32.mrf.mxu0
        %v852 = vadd.f32 %v795, %v851
        %v853 = vpop.f32.mrf.mxu0
        %854 = vdwg.mxu0
        %855 = vmatpush.bf16.msra.mxu0 0
        %856 = vmatpush.bf16.msra.mxu0 0
        %857 = vmatpush.bf16.msra.mxu0 0
        %858 = vmatpush.bf16.msra.mxu0 0
        %859 = vmatpush.bf16.msra.mxu0 %v830
        %860 = vmatpush.bf16.msra.mxu0 %v828
        %861 = vmatpush.bf16.msra.mxu0 %v826
        %862 = vmatpush.bf16.msra.mxu0 %v824
        %863 = vmatmul.bf16.gmra.mxu0 %v840
        %v864 = vpop.f32.mrf.mxu0
        %v865 = vadd.f32 %v796, %v864
        %v866 = vpop.f32.mrf.mxu0
        %867 = vdwg.mxu0
        %v868 = vmax.f32 %v852, 0.0
        %v869 = vmax.f32 %v865, 0.0
        %v870 = vpack.c.bf16 %v868, %v868
        %v871 = vpack.c.bf16 %v869, %v869
        %v872 = vld [vmem:[%s8] sm:$0xf]
        %v873 = vld [vmem:[%s8 + $0x4] sm:$0xf]
        %v874 = vld [vmem:[%s8 + $0x8] sm:$0xf]
        %v875 = vld [vmem:[%s8 + $0xc] sm:$0xf]
        %v876 = vld [vmem:[%s8 + $0x10] sm:$0xf]
        %v877 = vld [vmem:[%s8 + $0x14] sm:$0xf]
        %v878 = vld [vmem:[%s8 + $0x18] sm:$0xf]
        %v879 = vld [vmem:[%s8 + $0x1c] sm:$0xf]
        %v880 = vld [vmem:[%s8 + $0x20] sm:$0xf]
        %v881 = vld [vmem:[%s8 + $0x24] sm:$0xf]
        %v882 = vld [vmem:[%s8 + $0x28] sm:$0xf]
        %v883 = vld [vmem:[%s8 + $0x2c] sm:$0xf]
        %v884 = vld [vmem:[%s8 + $0x30] sm:$0xf]
        %v885 = vld [vmem:[%s8 + $0x34] sm:$0xf]
        %v886 = vld [vmem:[%s8 + $0x38] sm:$0xf]
        %v887 = vld [vmem:[%s8 + $0x3c] sm:$0xf]
        %v888 = vld [vmem:[%s8 + $0x40] sm:$0xf]
        %v889 = vld [vmem:[%s8 + $0x44] sm:$0xf]
        %v890 = vld [vmem:[%s8 + $0x48] sm:$0xf]
        %v891 = vld [vmem:[%s8 + $0x4c] sm:$0xf]
        %v892 = vld [vmem:[%s8 + $0x50] sm:$0xf]
        %v893 = vld [vmem:[%s8 + $0x54] sm:$0xf]
        %v894 = vld [vmem:[%s8 + $0x58] sm:$0xf]
        %v895 = vld [vmem:[%s8 + $0x5c] sm:$0xf]
        %v896 = vld [vmem:[%s8 + $0x60] sm:$0xf]
        %v897 = vld [vmem:[%s8 + $0x64] sm:$0xf]
        %v898 = vld [vmem:[%s8 + $0x68] sm:$0xf]
        %v899 = vld [vmem:[%s8 + $0x6c] sm:$0xf]
        %v900 = vld [vmem:[%s8 + $0x70] sm:$0xf]
        %v901 = vld [vmem:[%s8 + $0x74] sm:$0xf]
        %v902 = vld [vmem:[%s8 + $0x78] sm:$0xf]
        %v903 = vld [vmem:[%s8 + $0x7c] sm:$0xf]
        %v904 = vld [vmem:[%s9] sm:$0x1]
        %v906 = vperm.slane %v904, 0
        %v940 = vunpack.c.l.b16 %v872
        %v941 = vunpack.c.l.b16 %v873
        %v942 = vunpack.c.l.b16 %v874
        %v943 = vunpack.c.l.b16 %v875
        %v944 = vunpack.c.l.b16 %v876
        %v945 = vunpack.c.l.b16 %v877
        %v946 = vunpack.c.l.b16 %v878
        %v947 = vunpack.c.l.b16 %v879
        %v948 = vunpack.c.l.b16 %v880
        %v949 = vunpack.c.l.b16 %v881
        %v950 = vunpack.c.l.b16 %v882
        %v951 = vunpack.c.l.b16 %v883
        %v952 = vunpack.c.l.b16 %v884
        %v953 = vunpack.c.l.b16 %v885
        %v954 = vunpack.c.l.b16 %v886
        %v955 = vunpack.c.l.b16 %v887
        %v956 = vunpack.c.l.b16 %v888
        %v957 = vunpack.c.l.b16 %v889
        %v958 = vunpack.c.l.b16 %v890
        %v959 = vunpack.c.l.b16 %v891
        %v960 = vunpack.c.l.b16 %v892
        %v961 = vunpack.c.l.b16 %v893
        %v962 = vunpack.c.l.b16 %v894
        %v963 = vunpack.c.l.b16 %v895
        %v964 = vunpack.c.l.b16 %v896
        %v965 = vunpack.c.l.b16 %v897
        %v966 = vunpack.c.l.b16 %v898
        %v967 = vunpack.c.l.b16 %v899
        %v968 = vunpack.c.l.b16 %v900
        %v969 = vunpack.c.l.b16 %v901
        %v970 = vunpack.c.l.b16 %v902
        %v971 = vunpack.c.l.b16 %v903
        %v972 = vpack.c.b16 %v941, %v940
        %v973 = vpack.c.b16 %v943, %v942
        %v974 = vpack.c.b16 %v945, %v944
        %v975 = vpack.c.b16 %v947, %v946
        %v976 = vpack.c.b16 %v949, %v948
        %v977 = vpack.c.b16 %v951, %v950
        %v978 = vpack.c.b16 %v953, %v952
        %v979 = vpack.c.b16 %v955, %v954
        %v980 = vpack.c.b16 %v957, %v956
        %v981 = vpack.c.b16 %v959, %v958
        %v982 = vpack.c.b16 %v961, %v960
        %v983 = vpack.c.b16 %v963, %v962
        %v984 = vpack.c.b16 %v965, %v964
        %v985 = vpack.c.b16 %v967, %v966
        %v986 = vpack.c.b16 %v969, %v968
        %v987 = vpack.c.b16 %v971, %v970
        %1004 = vmatpush.bf16.msra.mxu0 %v979
        %1005 = vmatpush.bf16.msra.mxu0 %v978
        %1006 = vmatpush.bf16.msra.mxu0 %v977
        %1007 = vmatpush.bf16.msra.mxu0 %v976
        %1008 = vmatpush.bf16.msra.mxu0 %v975
        %1009 = vmatpush.bf16.msra.mxu0 %v974
        %1010 = vmatpush.bf16.msra.mxu0 %v973
        %1011 = vmatpush.bf16.msra.mxu0 %v972
        %1012 = vmatmul.bf16.gmra.mxu0 %v870
        %v1013 = vpop.f32.mrf.mxu0
        %v1014 = vadd.f32 %v906, %v1013
        %v1015 = vpop.f32.mrf.mxu0
        %1016 = vdwg.mxu0
        %1017 = vmatpush.bf16.msra.mxu0 %v987
        %1018 = vmatpush.bf16.msra.mxu0 %v986
        %1019 = vmatpush.bf16.msra.mxu0 %v985
        %1020 = vmatpush.bf16.msra.mxu0 %v984
        %1021 = vmatpush.bf16.msra.mxu0 %v983
        %1022 = vmatpush.bf16.msra.mxu0 %v982
        %1023 = vmatpush.bf16.msra.mxu0 %v981
        %1024 = vmatpush.bf16.msra.mxu0 %v980
        %1025 = vmatmul.bf16.gmra.mxu0 %v871
        %v1026 = vpop.f32.mrf.mxu0
        %v1027 = vadd.f32 %v1014, %v1026
        %v1028 = vpop.f32.mrf.mxu0
        %1029 = vdwg.mxu0
        %v1030 = vmax.f32 %v1027, 0.0
        %v1031 = vld [vmem:[%s10] sm:$0x1]
        %v1033 = vperm.slane %v1031, 0
        %v1035 = vmul.f32 %v1030, %v1033
        %v1036 = vsel %vm680, %v1035, 0.0
        %1037 = vadd.xlane.f32.xlu0 %v1036
        %v1038 = vpop.xlane.xlu0 %1037
        %v1039 = vld [vmem:[#allocation2] sm:$0x1]
        %v1041 = vperm.slane %v1039, 0
        %v1043 = vadd.f32 %v1038, %v1041
        %1045 = vset.pattern.permute.xlu0 0
        %1046 = vperm.xlu0 %1045, %v1043
        %v1047 = vpop.permute.xlu0 %1046
        %v1049 = vsub.f32 %v1047, %v674
        %v1050 = vmul.f32 %v1049, %v1049
        %v1051 = vmul.f32 %v783, %v1050
        %v1052 = vsel %vm680, %v1051, 0.0
        %1053 = vadd.xlane.f32.xlu0 %v1052
        %v1054 = vpop.xlane.xlu0 %1053
        %v1055 = vrot.slane %v1054, 4
        %v1056 = vadd.f32 %v1054, %v1055
        %v1057 = vrot.slane %v1056, 2
        %v1058 = vadd.f32 %v1056, %v1057
        %v1059 = vrot.slane %v1058, 1
        %v1060 = vadd.f32 %v1058, %v1059
        %s1061 = vtos %v1060
        %v1062 = vld [vmem:[#allocation7] sm:$0xff]
        %v1063 = vld [vmem:[#allocation7 + $0x8] sm:$0xff]
        %v1064 = vld [vmem:[#allocation7 + $0x10] sm:$0xff]
        %v1065 = vld [vmem:[#allocation7 + $0x18] sm:$0xff]
        %1066 = vxpose.xlu0.b32.start [1/16] %v673, 128
        %1067 = vxpose.xlu0.b32.cont [2/16] %v674, 128
        %1068 = vxpose.xlu0.b32.cont [3/16] 0.0, 128
        %1069 = vxpose.xlu0.b32.cont [4/16] 0.0, 128
        %1070 = vxpose.xlu0.b32.cont [5/16] 0.0, 128
        %1071 = vxpose.xlu0.b32.cont [6/16] 0.0, 128
        %1072 = vxpose.xlu0.b32.cont [7/16] 0.0, 128
        %1073 = vxpose.xlu0.b32.cont [8/16] 0.0, 128
        %1074 = vxpose.xlu0.b32.cont [9/16] 0.0, 128
        %1075 = vxpose.xlu0.b32.cont [10/16] 0.0, 128
        %1076 = vxpose.xlu0.b32.cont [11/16] 0.0, 128
        %1077 = vxpose.xlu0.b32.cont [12/16] 0.0, 128
        %1078 = vxpose.xlu0.b32.cont [13/16] 0.0, 128
        %1079 = vxpose.xlu0.b32.cont [14/16] 0.0, 128
        %1080 = vxpose.xlu0.b32.cont [15/16] 0.0, 128
        %1081 = vxpose.xlu0.b32.end [16/16] 0.0, 128
        %v1082 = vpop.trf.xlu0
        %v1083 = vpop.trf.xlu0
        %v1084 = vpop.trf.xlu0
        %v1085 = vpop.trf.xlu0
        %v1086 = vpop.trf.xlu0
        %v1087 = vpop.trf.xlu0
        %v1088 = vpop.trf.xlu0
        %v1089 = vpop.trf.xlu0
        %v1090 = vpop.trf.xlu0
        %v1091 = vpop.trf.xlu0
        %v1092 = vpop.trf.xlu0
        %v1093 = vpop.trf.xlu0
        %v1094 = vpop.trf.xlu0
        %v1095 = vpop.trf.xlu0
        %v1096 = vpop.trf.xlu0
        %v1097 = vpop.trf.xlu0
        %vm1098 = vcmask 130048
        %v1100 = vsel %vm1098, %v1082, 0
        %v1103 = vsel %vm1098, %v1083, 0
        %v1106 = vsel %vm1098, %v1084, 0
        %v1109 = vsel %vm1098, %v1085, 0
        %1111 = vmatpush.msra.mxu0 0.0
        %1112 = vmatpush.msra.mxu0 0.0
        %1113 = vmatpush.msra.mxu0 0.0
        %1114 = vmatpush.msra.mxu0 0.0
        %1115 = vmatpush.msra.mxu0 0.0
        %1116 = vmatpush.msra.mxu0 0.0
        %1117 = vmatpush.msra.mxu0 0.0
        %1118 = vmatpush.msra.mxu0 0.0
        %1119 = vmatpush.msra.mxu0 0.0
        %1120 = vmatpush.msra.mxu0 0.0
        %1121 = vmatpush.msra.mxu0 0.0
        %1122 = vmatpush.msra.mxu0 0.0
        %1123 = vmatpush.msra.mxu0 0.0
        %1124 = vmatpush.msra.mxu0 0.0
        %1125 = vmatpush.msra.mxu0 %v674
        %1126 = vmatpush.msra.mxu0 %v673
        %1127 = vmatmul.f32.gmra.mxu0 %v1100
        %v1128 = vpop.f32.mrf.mxu0
        %v1129 = vadd.f32 0.0, %v1128
        %1130 = vmatmul.f32.gmra.mxu0 %v1103
        %v1131 = vpop.f32.mrf.mxu0
        %v1132 = vadd.f32 0.0, %v1131
        %1133 = vmatmul.f32.gmra.mxu0 %v1106
        %v1134 = vpop.f32.mrf.mxu0
        %v1135 = vadd.f32 0.0, %v1134
        %1136 = vmatmul.f32.gmra.mxu0 %v1109
        %v1137 = vpop.f32.mrf.mxu0
        %v1138 = vadd.f32 0.0, %v1137
        %1139 = vdwg.mxu0
        %v1140 = vadd.f32 %v1062, %v1129
        %v1141 = vadd.f32 %v1063, %v1132
        %v1142 = vadd.f32 %v1064, %v1135
        %v1143 = vadd.f32 %v1065, %v1138
        %1144 = vst.msk [vmem:[#allocation7] sm:$0xff] %vm680, %v1140
        %1145 = vst.msk [vmem:[#allocation7 + $0x8] sm:$0xff] %vm680, %v1141
        %1146 = vst.msk [vmem:[#allocation7 + $0x10] sm:$0xff] %vm680, %v1142
        %1147 = vst.msk [vmem:[#allocation7 + $0x18] sm:$0xff] %vm680, %v1143
        %v1148 = vld [vmem:[#allocation5] sm:$0x1]
        %v1149 = vadd.f32 %v673, %v674
        %v1150 = vsel %vm680, %v1149, 0.0
        %v1151 = vrot.slane %v1150, 4
        %v1152 = vadd.f32 %v1150, %v1151
        %v1153 = vrot.slane %v1152, 2
        %v1154 = vadd.f32 %v1152, %v1153
        %v1155 = vrot.slane %v1154, 1
        %v1156 = vadd.f32 %v1154, %v1155
        %v1157 = vadd.f32 %v1148, %v1156
        %vm1158 = vcmask 253952
        %1159 = vst.msk [vmem:[#allocation5] sm:$0x1] %vm1158, %v1157
        %v1160 = vlaneseq
        %v1161 = vand.u32 %v1160, 127
        %v1162 = vld [vmem:[#allocation3] sm:$0x1]
        %vm1163 = vcmp.eq.s32.totalorder %v1161, 0
        %v1164 = vstv %s775
        %v1165 = vsel %vm1163, %v1164, 0.0
        %vm1166 = vcmp.eq.s32.totalorder %v1161, 1
        %v1167 = vstv %s1061
        %v1168 = vsel %vm1166, %v1167, 0.0
        %v1169 = vadd.f32 %v1165, %v1168
        %v1170 = vadd.f32 %v1162, %v1169
        %1171 = vst [vmem:[#allocation3] sm:$0x1] %v1170
        %vm1172 = vcmp.gt.f32.partialorder %v740, 0.0
        %v1173 = vsel %vm1172, 1, 0
        %v1174 = vcvt.s32.f32 %v1173
        %vm1175 = vcmask 31744
        %v1176 = vsel %vm1175, %v1174, 0.0
        %1177 = vadd.xlane.f32.xlu0 %v1176
        %v1178 = vpop.xlane.xlu0 %1177
        %v1179 = vmul.f32 %v1178, 8.0
        %v1180 = vadd.f32 %v1179, 1.0
        %v1181 = vlog2.pop %v1180
        %v1182 = vmul.f32 %v1181, 0.6931472
        %vm1183 = vcmask 7168
        %1184 = vst.msk [vmem:[%s655] sm:$0xff] %vm1183, %v1182
        %s1185 = smul.u32 %s35, 2
        %s1186 = sadd.s32 %s1185, %s36
        %p1187 = scmp.lt.s32.totalorder %s1186, 1
        %s1188 = scalar_select %p1187, %s1186, 1
        %s1189 = smul.addr %s1188, 8
        %s1190 = scalar_lea.vmem %s15, %s1189
        // Predicated region
        $region73: #{tpu_custom_call.1} parent=67 // pred_check
          %p1191 = pneg %p358
        $region74: #{tpu_custom_call.1} parent=67 // pred_check_branch
          %1193 = sbr.rel (%p1191) target = $region76
        $region75: #{tpu_custom_call.1} parent=67 // pred_region
          %1195 = vsyncadd [#allocation4], 0
          %s1196 = scalar_lea.hbm %s12, %s35
          %s1198 = sshll.u32 [#allocation3], 4
          %s1199 = int_to_ptr.vmem [resolvable:$true] %s1198
          %s1200 = sshll.u32 %s1196, 4
          %s1201 = int_to_ptr.hbm [resolvable:$true] %s1200
          %1203 = dma.vmem_to_hbm [thread:$0]  %s1199, 16, %s1201, [#allocation4]
        $region76: #{tpu_custom_call.1} parent=67 // pred_fallthru
          _
        // Predicated region
        $region77: #{tpu_custom_call.1} parent=67 // pred_check
          %p1204 = pneg %p384
        $region78: #{tpu_custom_call.1} parent=67 // pred_check_branch
          %1206 = sbr.rel (%p1204) target = $region80
        $region79: #{tpu_custom_call.1} parent=67 // pred_region
          %1208 = vsyncadd [#allocation6], 0
          %s1209 = scalar_lea.hbm %s13, %s35
          %s1211 = sshll.u32 [#allocation5], 4
          %s1212 = int_to_ptr.vmem [resolvable:$true] %s1211
          %s1213 = sshll.u32 %s1209, 4
          %s1214 = int_to_ptr.hbm [resolvable:$true] %s1213
          %1216 = dma.vmem_to_hbm [thread:$0]  %s1212, 16, %s1214, [#allocation6]
        $region80: #{tpu_custom_call.1} parent=67 // pred_fallthru
          _
        // Predicated region
        $region81: #{tpu_custom_call.1} parent=67 // pred_check
          %p1217 = pneg %p410
        $region82: #{tpu_custom_call.1} parent=67 // pred_check_branch
          %1219 = sbr.rel (%p1217) target = $region84
        $region83: #{tpu_custom_call.1} parent=67 // pred_region
          %1221 = vsyncadd [#allocation6], 0
          %s1222 = smul.addr %s35, 4
          %s1223 = smul.addr %s1222, 8
          %s1224 = scalar_lea.hbm %s14, %s1223
          %s1225 = sshll.u32 [#allocation7], 4
          %s1226 = int_to_ptr.vmem [resolvable:$true] %s1225
          %s1227 = sshll.u32 %s1224, 4
          %s1228 = int_to_ptr.hbm [resolvable:$true] %s1227
          %1233 = dma.vmem_to_hbm [thread:$0]  %s1226, 512, %s1228, [#allocation6], 128, 128, 8
        $region84: #{tpu_custom_call.1} parent=67 // pred_fallthru
          _
        // Predicated region
        $region85: #{tpu_custom_call.1} parent=67 // pred_check
          %p1234 = pneg %p440
        $region86: #{tpu_custom_call.1} parent=67 // pred_check_branch
          %1236 = sbr.rel (%p1234) target = $region88
        $region87: #{tpu_custom_call.1} parent=67 // pred_region
          %s1237 = smul.u32 %s35, 2
          %s1238 = sadd.s32 %s1237, %s36
        $region88: #{tpu_custom_call.1} parent=67 // pred_fallthru
          _
        // Predicated region
        $region89: #{tpu_custom_call.1} parent=67 // pred_check
          %p1239 = pneg %p358
        $region90: #{tpu_custom_call.1} parent=67 // pred_check_branch
          %1241 = sbr.rel (%p1239) target = $region92
        $region91: #{tpu_custom_call.1} parent=67 // pred_region
          %1243 = dma.done [#allocation4], 16
        $region92: #{tpu_custom_call.1} parent=67 // pred_fallthru
          _
        // Predicated region
        $region93: #{tpu_custom_call.1} parent=67 // pred_check
          %p1244 = pneg %p384
        $region94: #{tpu_custom_call.1} parent=67 // pred_check_branch
          %1246 = sbr.rel (%p1244) target = $region96
        $region95: #{tpu_custom_call.1} parent=67 // pred_region
          %1248 = dma.done [#allocation6], 16
        $region96: #{tpu_custom_call.1} parent=67 // pred_fallthru
          _
        // Predicated region
        $region97: #{tpu_custom_call.1} parent=67 // pred_check
          %p1249 = pneg %p410
        $region98: #{tpu_custom_call.1} parent=67 // pred_check_branch
          %1251 = sbr.rel (%p1249) target = $region100
        $region99: #{tpu_custom_call.1} parent=67 // pred_region
          %1253 = dma.done [#allocation6], 512
        $region100: #{tpu_custom_call.1} parent=67 // pred_fallthru
          _
      $region68: #{tpu_custom_call.1} parent=5 // pred_fallthru
        _
      %p1254 = scmp.le.s32.totalorder 2, %s26
      // Predicated region
      $region101: #{tpu_custom_call.1} parent=5 // pred_check
        %p1255 = pneg %p1254
      $region102: #{tpu_custom_call.1} parent=5 // pred_check_branch
        %1257 = sbr.rel (%p1255) target = $region104
      $region103: #{tpu_custom_call.1} parent=5 // pred_region
        %s1258 = ssub.s32 %s26, 2
        // Predicated region
        $region105: #{tpu_custom_call.1} parent=103 // pred_check
          %p1259 = pneg %p446
        $region106: #{tpu_custom_call.1} parent=103 // pred_check_branch
          %1261 = sbr.rel (%p1259) target = $region108
        $region107: #{tpu_custom_call.1} parent=103 // pred_region
          %s1262 = smul.u32 %s37, 2
          %s1263 = sadd.s32 %s1262, %s38
          %p1264 = scmp.lt.s32.totalorder %s1263, 1
          %s1265 = scalar_select %p1264, %s1263, 1
          %s1266 = smul.addr %s1265, 8
          %s1267 = scalar_lea.vmem %s15, %s1266
        $region108: #{tpu_custom_call.1} parent=103 // pred_fallthru
          _
      $region104: #{tpu_custom_call.1} parent=5 // pred_fallthru
        _
    $region6: #{tpu_custom_call.1} parent=1 // loop_footer
      %s30 = sadd.s32 1, %s26
    $region7: #{tpu_custom_call.1} parent=1 // loop_footer_branch
      %25 = sbr.rel target = $region3
    $region8: #{tpu_custom_call.1} parent=1 // loop_exit
      _
    %1268 = vsyncpa [#allocation4], 1
    %s1269 = scalar_lea.sflag [#allocation4], 1
    %1270 = vsyncpa %s1269, 1
    %1271 = vsyncpa [#allocation6], 1

</llo_original>
